<compile_context>
chip_gen: v5e
topology: v5e:2x2
jax: 0.10.0
libtpu: 0.0.40
codegen_flags: <defaults>
</compile_context>

<pallas_src>
import jax
import jax.numpy as jnp
import numpy as np
from jax.experimental import pallas as pl
from jax.experimental.pallas import tpu as pltpu


# ---------------------------------------------------------------------------
# helpers
# ---------------------------------------------------------------------------
def _round_up(x, m):
    return ((x + m - 1) // m) * m


def _tpu_memory_params():
    """(vmem_limit_bytes, mode-block budget bytes, num TensorCores per chip)."""
    physical = 64 * 1024 * 1024          # conservative default = v7x (smallest VMEM)
    num_cores = 1
    try:
        info = pltpu.get_tpu_info()
        for name in ("vmem_capacity_bytes", "vmem_bytes", "vmem_size_bytes"):
            v = getattr(info, name, None)
            if v:
                physical = int(v)
                break
        for name in ("num_tensorcores", "tensorcore_count", "num_cores",
                     "cores_per_chip"):
            v = getattr(info, name, None)
            if v:
                num_cores = int(v)
                break
    except Exception:
        pass
    if num_cores == 1:
        try:
            if "v7" in jax.devices()[0].device_kind.lower():
                num_cores = 2        # v7x: 2 TensorCores per chip
        except Exception:
            pass
    vmem_limit = int(physical * 0.8)          # stays under physical on every gen
    budget = int(vmem_limit * 0.65)           # headroom over the double-buffered blocks
    return vmem_limit, budget, num_cores


def _choose_mode_block(P, per_mode_bytes, vmem_budget, prefer_even_steps):
    """Largest divisor of P whose double-buffered block fits the budget.

    When >1 TensorCore is available, prefer a divisor giving an EVEN number of
    grid steps so dimension_semantics=("parallel",) keeps both cores busy.
    """
    cap = max(1, vmem_budget // max(1, 2 * per_mode_bytes))   # x2: double-buffering
    cap = min(cap, P)
    divisors = [d for d in range(1, P + 1) if P % d == 0 and d <= cap]
    if prefer_even_steps and P > 1:
        even = [d for d in divisors if (P // d) % 2 == 0]
        if even:
            return max(even)
    return max(divisors)


# ---------------------------------------------------------------------------
# Pallas kernel: per-mode complex channel contraction as four real MXU matmuls
# ---------------------------------------------------------------------------
def _spectral_modes_kernel(xr_ref, xi_ref, wr_ref, wi_ref, or_ref, oi_ref):
    """For every retained Fourier mode p in this block:
         out_r[p] = xr[p] @ wr[p] - xi[p] @ wi[p]
         out_i[p] = xr[p] @ wi[p] + xi[p] @ wr[p]

    Block shapes (resident in VMEM):
      xr_ref, xi_ref : (Pb, Bp, Ci)  bf16 (rows = batch)
      wr_ref, wi_ref : (Pb, Ci, Co)  bf16
      or_ref, oi_ref : (Pb, Bp, Co)  f32  (MXU accumulates in f32)
    """
    dn = (((2,), (1,)), ((0,), (0,)))           # contract Ci, batch over modes
    xr = xr_ref[...]
    xi = xi_ref[...]
    wr = wr_ref[...]
    wi = wi_ref[...]
    rr = jax.lax.dot_general(xr, wr, dn, preferred_element_type=jnp.float32)
    ii = jax.lax.dot_general(xi, wi, dn, preferred_element_type=jnp.float32)
    ri = jax.lax.dot_general(xr, wi, dn, preferred_element_type=jnp.float32)
    ir = jax.lax.dot_general(xi, wr, dn, preferred_element_type=jnp.float32)
    or_ref[...] = rr - ii
    oi_ref[...] = ri + ir


def _spectral_complex_mul(xr, xi, wr, wi, Pb, vmem_limit):
    P, Bp, Ci = xr.shape
    Co = wr.shape[2]
    x_spec = pl.BlockSpec((Pb, Bp, Ci), lambda p: (p, 0, 0))
    w_spec = pl.BlockSpec((Pb, Ci, Co), lambda p: (p, 0, 0))
    o_spec = pl.BlockSpec((Pb, Bp, Co), lambda p: (p, 0, 0))
    # TODO(synk): if a huge B*Ci ever forces Pb -> 1, add an inner batch grid
    # axis whose weight index_map ignores it, so weight blocks stay resident.
    return pl.pallas_call(
        _spectral_modes_kernel,
        out_shape=(jax.ShapeDtypeStruct((P, Bp, Co), jnp.float32),
                   jax.ShapeDtypeStruct((P, Bp, Co), jnp.float32)),
        grid_spec=pltpu.PrefetchScalarGridSpec(
            num_scalar_prefetch=0,
            grid=(P // Pb,),
            in_specs=[x_spec, x_spec, w_spec, w_spec],
            out_specs=[o_spec, o_spec],
        ),
        compiler_params=pltpu.CompilerParams(
            dimension_semantics=("parallel",),
            vmem_limit_bytes=vmem_limit,
        ),
    )(xr, xi, wr, wi)


# ---------------------------------------------------------------------------
# weight packing — call ONCE per parameter update, not per forward pass
# ---------------------------------------------------------------------------
def pack_spectral_weights(w1, w2, compute_dtype=jnp.bfloat16):
    """Pack weights1/weights2 (Ci, Co, m1, m2) complex into the kernel layout.

    Returns (wr, wi), each (P=2*m1*m2, Ci, Co) in `compute_dtype`.  This is the
    per-parameter precompute the performance review asked to hoist out of the
    forward path.
    """
    Ci, Co, m1, m2 = w1.shape
    P = 2 * m1 * m2
    w_all = jnp.concatenate([w1, w2], axis=2).reshape(Ci, Co, P)
    wr = jnp.transpose(jnp.real(w_all), (2, 0, 1)).astype(compute_dtype)
    wi = jnp.transpose(jnp.imag(w_all), (2, 0, 1)).astype(compute_dtype)
    return wr, wi


# ---------------------------------------------------------------------------
# forward pass equivalent to SpectralConv2d_fast.forward
# ---------------------------------------------------------------------------
def spectral_conv2d_fast(x, wr, wi, modes1, modes2):
    """x: (B, Cin, H, W) f32;  wr, wi: packed weights from pack_spectral_weights."""
    B, Ci, H, W = x.shape
    Co = wr.shape[2]
    Wf = W // 2 + 1
    m1, m2 = modes1, modes2
    P = 2 * m1 * m2
    assert H >= 2 * m1 and m2 <= Wf, "modes must fit the rFFT grid"
    assert wr.shape == (P, Ci, Co) and wi.shape == (P, Ci, Co)
    compute_dtype = wr.dtype

    # ---- FFT + mode gather (plain JAX glue) ----
    # TODO(synk): rfft2/irfft2 and the corner gather/scatter stay in XLA; there
    # is no Pallas FFT primitive.
    x_ft = jnp.fft.rfft2(x)                                          # (B,Ci,H,Wf) c64
    corners = jnp.concatenate(
        [x_ft[:, :, :m1, :m2], x_ft[:, :, H - m1:, :m2]], axis=2)    # (B,Ci,2m1,m2)
    corners = jnp.transpose(corners.reshape(B, Ci, P), (2, 0, 1))    # (P,B,Ci)
    xr = jnp.real(corners).astype(compute_dtype)
    xi = jnp.imag(corners).astype(compute_dtype)

    # Pad batch to an 8-sublane multiple (cheap); channel axes stay unpadded.
    Bp = _round_up(B, 8)
    if Bp != B:
        pad = ((0, 0), (0, Bp - B), (0, 0))
        xr = jnp.pad(xr, pad)
        xi = jnp.pad(xi, pad)

    # ---- pick the mode block from the actual chip's VMEM ----
    vmem_limit, vmem_budget, num_cores = _tpu_memory_params()
    itemsize = jnp.dtype(compute_dtype).itemsize
    per_mode_bytes = (2 * Bp * Ci + 2 * Ci * Co) * itemsize + 2 * Bp * Co * 4
    Pb = _choose_mode_block(P, per_mode_bytes, vmem_budget,
                            prefer_even_steps=(num_cores > 1))

    out_r, out_i = _spectral_complex_mul(xr, xi, wr, wi, Pb, vmem_limit)

    # ---- unpack (strip batch padding) and reassemble out_ft ----
    out_r = out_r[:, :B, :]
    out_i = out_i[:, :B, :]
    out_modes = (out_r + 1j * out_i).astype(jnp.complex64)           # (P,B,Co)
    out_modes = jnp.transpose(out_modes, (1, 2, 0)).reshape(B, Co, 2 * m1, m2)

    mid = jnp.zeros((B, Co, H - 2 * m1, m2), jnp.complex64)
    out_ft = jnp.concatenate(
        [out_modes[:, :, :m1, :], mid, out_modes[:, :, m1:, :]], axis=2)
    out_ft = jnp.pad(out_ft, ((0, 0), (0, 0), (0, 0), (0, Wf - m2)))

    return jnp.fft.irfft2(out_ft, s=(H, W))


# ---------------------------------------------------------------------------
# pure-JAX reference mirroring the PyTorch module
# ---------------------------------------------------------------------------
def _reference(x, w1, w2, modes1, modes2):
    B, Ci, H, W = x.shape
    Co = w1.shape[1]
    Wf = W // 2 + 1
    x_ft = jnp.fft.rfft2(x)
    out_ft = jnp.zeros((B, Co, H, Wf), dtype=jnp.complex64)
    out_ft = out_ft.at[:, :, :modes1, :modes2].set(
        jnp.einsum('bixy,ioxy->boxy', x_ft[:, :, :modes1, :modes2], w1))
    out_ft = out_ft.at[:, :, H - modes1:, :modes2].set(
        jnp.einsum('bixy,ioxy->boxy', x_ft[:, :, H - modes1:, :modes2], w2))
    return jnp.fft.irfft2(out_ft, s=(H, W))


if __name__ == "__main__":
    # Small shapes consistent with the module: batch=2, in=4, out=4 channels,
    # 16x16 spatial grid, modes1 = modes2 = 4.
    B, Cin, Cout, H, W = 2, 4, 4, 16, 16
    modes1, modes2 = 4, 4
    scale = 1.0 / (Cin * Cout)

    key = jax.random.PRNGKey(0)
    kx, k1r, k1i, k2r, k2i = jax.random.split(key, 5)

    x = jax.random.normal(kx, (B, Cin, H, W), dtype=jnp.float32)
    # torch.rand(..., dtype=torch.cfloat): real and imag parts ~ U[0, 1)
    w1 = (scale * jax.random.uniform(k1r, (Cin, Cout, modes1, modes2))
          + 1j * scale * jax.random.uniform(k1i, (Cin, Cout, modes1, modes2))
          ).astype(jnp.complex64)
    w2 = (scale * jax.random.uniform(k2r, (Cin, Cout, modes1, modes2))
          + 1j * scale * jax.random.uniform(k2i, (Cin, Cout, modes1, modes2))
          ).astype(jnp.complex64)

    # Packed once, alongside the parameters (not per forward call).
    wr, wi = pack_spectral_weights(w1, w2, compute_dtype=jnp.bfloat16)

    out = spectral_conv2d_fast(x, wr, wi, modes1, modes2)
    out = jax.block_until_ready(out)

    ref = jax.block_until_ready(_reference(x, w1, w2, modes1, modes2))
    assert out.shape == (B, Cout, H, W)
    # bf16 MXU operands (f32 accumulation) carry ~0.4-1% relative rounding vs
    # the complex64 XLA einsum reference; tolerances are set accordingly.
    np.testing.assert_allclose(np.asarray(out), np.asarray(ref),
                               rtol=3e-2, atol=5e-3)

    print("KERNEL_OK")
</pallas_src>

<mosaic_0001>
module attributes {stable_mosaic.version = 11 : i64} {
  func.func @_spectral_modes_kernel(%arg0: i32, %arg1: memref<32x8x4xbf16, #tpu.memory_space<vmem>>, %arg2: memref<32x8x4xbf16, #tpu.memory_space<vmem>>, %arg3: memref<32x4x4xbf16, #tpu.memory_space<vmem>>, %arg4: memref<32x4x4xbf16, #tpu.memory_space<vmem>>, %arg5: memref<32x8x4xf32, #tpu.memory_space<vmem>>, %arg6: memref<32x8x4xf32, #tpu.memory_space<vmem>>) attributes {dimension_semantics = [#tpu.dimension_semantics<parallel>], iteration_bounds = array<i64: 1>, scalar_prefetch = 0 : i64, scratch_operands = 0 : i64, tpu.core_type = #tpu.core_type<tc>, window_params = [{transform_indices = @transform_0, window_bounds = array<i64: 32, 8, 4>}, {transform_indices = @transform_1, window_bounds = array<i64: 32, 8, 4>}, {transform_indices = @transform_2, window_bounds = array<i64: 32, 4, 4>}, {transform_indices = @transform_3, window_bounds = array<i64: 32, 4, 4>}, {transform_indices = @transform_4, window_bounds = array<i64: 32, 8, 4>}, {transform_indices = @transform_5, window_bounds = array<i64: 32, 8, 4>}]} {
    %c0 = arith.constant 0 : index
    %c0_0 = arith.constant 0 : index
    %c0_1 = arith.constant 0 : index
    %0 = vector.load %arg1[%c0, %c0_0, %c0_1] : memref<32x8x4xbf16, #tpu.memory_space<vmem>>, vector<32x8x4xbf16>
    %c0_2 = arith.constant 0 : index
    %c0_3 = arith.constant 0 : index
    %c0_4 = arith.constant 0 : index
    %1 = vector.load %arg2[%c0_2, %c0_3, %c0_4] : memref<32x8x4xbf16, #tpu.memory_space<vmem>>, vector<32x8x4xbf16>
    %c0_5 = arith.constant 0 : index
    %c0_6 = arith.constant 0 : index
    %c0_7 = arith.constant 0 : index
    %2 = vector.load %arg3[%c0_5, %c0_6, %c0_7] : memref<32x4x4xbf16, #tpu.memory_space<vmem>>, vector<32x4x4xbf16>
    %c0_8 = arith.constant 0 : index
    %c0_9 = arith.constant 0 : index
    %c0_10 = arith.constant 0 : index
    %3 = vector.load %arg4[%c0_8, %c0_9, %c0_10] : memref<32x4x4xbf16, #tpu.memory_space<vmem>>, vector<32x4x4xbf16>
    %cst = arith.constant dense<0.000000e+00> : vector<32x8x4xf32>
    %4 = tpu.matmul %0, %2, %cst {dimension_numbers = #tpu.dot_dimension_numbers<[2], [1], [1], [2], [0, 0, 0, 1, 1, 2], [0], [0]>} : vector<32x8x4xbf16>, vector<32x4x4xbf16>, vector<32x8x4xf32> -> vector<32x8x4xf32>
    %cst_11 = arith.constant dense<0.000000e+00> : vector<32x8x4xf32>
    %5 = tpu.matmul %1, %3, %cst_11 {dimension_numbers = #tpu.dot_dimension_numbers<[2], [1], [1], [2], [0, 0, 0, 1, 1, 2], [0], [0]>} : vector<32x8x4xbf16>, vector<32x4x4xbf16>, vector<32x8x4xf32> -> vector<32x8x4xf32>
    %cst_12 = arith.constant dense<0.000000e+00> : vector<32x8x4xf32>
    %6 = tpu.matmul %0, %3, %cst_12 {dimension_numbers = #tpu.dot_dimension_numbers<[2], [1], [1], [2], [0, 0, 0, 1, 1, 2], [0], [0]>} : vector<32x8x4xbf16>, vector<32x4x4xbf16>, vector<32x8x4xf32> -> vector<32x8x4xf32>
    %cst_13 = arith.constant dense<0.000000e+00> : vector<32x8x4xf32>
    %7 = tpu.matmul %1, %2, %cst_13 {dimension_numbers = #tpu.dot_dimension_numbers<[2], [1], [1], [2], [0, 0, 0, 1, 1, 2], [0], [0]>} : vector<32x8x4xbf16>, vector<32x4x4xbf16>, vector<32x8x4xf32> -> vector<32x8x4xf32>
    %8 = arith.subf %4, %5 : vector<32x8x4xf32>
    %c0_14 = arith.constant 0 : index
    %c0_15 = arith.constant 0 : index
    %c0_16 = arith.constant 0 : index
    %9 = vector.load %arg5[%c0_14, %c0_15, %c0_16] : memref<32x8x4xf32, #tpu.memory_space<vmem>>, vector<32x8x4xf32>
    tpu.vector_store %arg5[%c0_14, %c0_15, %c0_16], %8 {strides = array<i32>} : memref<32x8x4xf32, #tpu.memory_space<vmem>>, vector<32x8x4xf32>,
    %10 = arith.addf %6, %7 : vector<32x8x4xf32>
    %c0_17 = arith.constant 0 : index
    %c0_18 = arith.constant 0 : index
    %c0_19 = arith.constant 0 : index
    %11 = vector.load %arg6[%c0_17, %c0_18, %c0_19] : memref<32x8x4xf32, #tpu.memory_space<vmem>>, vector<32x8x4xf32>
    tpu.vector_store %arg6[%c0_17, %c0_18, %c0_19], %10 {strides = array<i32>} : memref<32x8x4xf32, #tpu.memory_space<vmem>>, vector<32x8x4xf32>,
    return
  }
  func.func @transform_0(%arg0: i32) -> (i32, i32, i32) {
    %c0_i32 = arith.constant 0 : i32
    %c0_i32_0 = arith.constant 0 : i32
    %c0_i32_1 = arith.constant 0 : i32
    return %arg0, %c0_i32, %c0_i32_0 : i32, i32, i32
  }
  func.func @transform_1(%arg0: i32) -> (i32, i32, i32) {
    %c0_i32 = arith.constant 0 : i32
    %c0_i32_0 = arith.constant 0 : i32
    %c0_i32_1 = arith.constant 0 : i32
    return %arg0, %c0_i32, %c0_i32_0 : i32, i32, i32
  }
  func.func @transform_2(%arg0: i32) -> (i32, i32, i32) {
    %c0_i32 = arith.constant 0 : i32
    %c0_i32_0 = arith.constant 0 : i32
    %c0_i32_1 = arith.constant 0 : i32
    return %arg0, %c0_i32, %c0_i32_0 : i32, i32, i32
  }
  func.func @transform_3(%arg0: i32) -> (i32, i32, i32) {
    %c0_i32 = arith.constant 0 : i32
    %c0_i32_0 = arith.constant 0 : i32
    %c0_i32_1 = arith.constant 0 : i32
    return %arg0, %c0_i32, %c0_i32_0 : i32, i32, i32
  }
  func.func @transform_4(%arg0: i32) -> (i32, i32, i32) {
    %c0_i32 = arith.constant 0 : i32
    %c0_i32_0 = arith.constant 0 : i32
    %c0_i32_1 = arith.constant 0 : i32
    return %arg0, %c0_i32, %c0_i32_0 : i32, i32, i32
  }
  func.func @transform_5(%arg0: i32) -> (i32, i32, i32) {
    %c0_i32 = arith.constant 0 : i32
    %c0_i32_0 = arith.constant 0 : i32
    %c0_i32_1 = arith.constant 0 : i32
    return %arg0, %c0_i32, %c0_i32_0 : i32, i32, i32
  }
}

</mosaic_0001>

<llo_original>
// kernel: tpu_custom_call.1
$region0: #{tpu_custom_call.1}
  #allocation0 [shape = 'u32[]', space=smem, size = 0x4, offset = 0x4, fixed_abs, tag = 'smem constant byte address 0x4 - core index']
  #allocation1 [shape = 'u32[72,128]{1,0:T(1,128)}', space=vmem, size = 0x9000, scoped, tag = 'internal scratch']
  %s0 = inlined_call_operand.vmem [shape: bf16[32,8,4], index: 0, kind: input, shape index: {}]
  %s1 = inlined_call_operand.vmem [shape: bf16[32,8,4], index: 1, kind: input, shape index: {}]
  %s2 = inlined_call_operand.vmem [shape: bf16[32,4,4], index: 2, kind: input, shape index: {}]
  %s3 = inlined_call_operand.vmem [shape: bf16[32,4,4], index: 3, kind: input, shape index: {}]
  %s4 = inlined_call_operand.vmem [shape: f32[32,8,4], index: 4, kind: output, shape index: {0}]
  %s5 = inlined_call_operand.vmem [shape: f32[32,8,4], index: 5, kind: output, shape index: {1}]
  %6 = xla_tuple %s4, %s5
  %s7 = sld [smem:[#allocation0]]
  $region34: #{tpu_custom_call.1} parent=0
    _
  %s9 = ssub.s32 1, %s7
  %s10 = scalar_select 0, %s9, %s7
  // Predicated region
  $region2: #{tpu_custom_call.1} parent=0 // pred_check
    _
  $region3: #{tpu_custom_call.1} parent=0 // pred_check_branch
    %12 = sbr.rel (0) target = $region5
  $region4: #{tpu_custom_call.1} parent=0 // pred_region
    _
  $region5: #{tpu_custom_call.1} parent=0 // pred_fallthru
    _
  // Predicated region
  $region6: #{tpu_custom_call.1} parent=0 // pred_check
    _
  $region7: #{tpu_custom_call.1} parent=0 // pred_check_branch
    %14 = sbr.rel (0) target = $region9
  $region8: #{tpu_custom_call.1} parent=0 // pred_region
    _
  $region9: #{tpu_custom_call.1} parent=0 // pred_fallthru
    _
  // Predicated region
  $region10: #{tpu_custom_call.1} parent=0 // pred_check
    _
  $region11: #{tpu_custom_call.1} parent=0 // pred_check_branch
    %16 = sbr.rel (0) target = $region13
  $region12: #{tpu_custom_call.1} parent=0 // pred_region
    _
  $region13: #{tpu_custom_call.1} parent=0 // pred_fallthru
    _
  // Predicated region
  $region14: #{tpu_custom_call.1} parent=0 // pred_check
    _
  $region15: #{tpu_custom_call.1} parent=0 // pred_check_branch
    %18 = sbr.rel (0) target = $region17
  $region16: #{tpu_custom_call.1} parent=0 // pred_region
    _
  $region17: #{tpu_custom_call.1} parent=0 // pred_fallthru
    _
  %v20 = vld [vmem:[%s0] sm:$0xf]
  %v21 = vld [vmem:[%s0 + $0x4] sm:$0xf]
  %v22 = vld [vmem:[%s0 + $0x8] sm:$0xf]
  %v23 = vld [vmem:[%s0 + $0xc] sm:$0xf]
  %v24 = vld [vmem:[%s0 + $0x10] sm:$0xf]
  %v25 = vld [vmem:[%s0 + $0x14] sm:$0xf]
  %v26 = vld [vmem:[%s0 + $0x18] sm:$0xf]
  %v27 = vld [vmem:[%s0 + $0x1c] sm:$0xf]
  %v28 = vld [vmem:[%s0 + $0x20] sm:$0xf]
  %v29 = vld [vmem:[%s0 + $0x24] sm:$0xf]
  %v30 = vld [vmem:[%s0 + $0x28] sm:$0xf]
  %v31 = vld [vmem:[%s0 + $0x2c] sm:$0xf]
  %v32 = vld [vmem:[%s0 + $0x30] sm:$0xf]
  %v33 = vld [vmem:[%s0 + $0x34] sm:$0xf]
  %v34 = vld [vmem:[%s0 + $0x38] sm:$0xf]
  %v35 = vld [vmem:[%s0 + $0x3c] sm:$0xf]
  %v36 = vld [vmem:[%s0 + $0x40] sm:$0xf]
  %v37 = vld [vmem:[%s0 + $0x44] sm:$0xf]
  %v38 = vld [vmem:[%s0 + $0x48] sm:$0xf]
  %v39 = vld [vmem:[%s0 + $0x4c] sm:$0xf]
  %v40 = vld [vmem:[%s0 + $0x50] sm:$0xf]
  %v41 = vld [vmem:[%s0 + $0x54] sm:$0xf]
  %v42 = vld [vmem:[%s0 + $0x58] sm:$0xf]
  %v43 = vld [vmem:[%s0 + $0x5c] sm:$0xf]
  %v44 = vld [vmem:[%s0 + $0x60] sm:$0xf]
  %v45 = vld [vmem:[%s0 + $0x64] sm:$0xf]
  %v46 = vld [vmem:[%s0 + $0x68] sm:$0xf]
  %v47 = vld [vmem:[%s0 + $0x6c] sm:$0xf]
  %v48 = vld [vmem:[%s0 + $0x70] sm:$0xf]
  %v49 = vld [vmem:[%s0 + $0x74] sm:$0xf]
  %v50 = vld [vmem:[%s0 + $0x78] sm:$0xf]
  %v51 = vld [vmem:[%s0 + $0x7c] sm:$0xf]
  %v52 = vld [vmem:[%s1] sm:$0xf]
  %v53 = vld [vmem:[%s1 + $0x4] sm:$0xf]
  %v54 = vld [vmem:[%s1 + $0x8] sm:$0xf]
  %v55 = vld [vmem:[%s1 + $0xc] sm:$0xf]
  %v56 = vld [vmem:[%s1 + $0x10] sm:$0xf]
  %v57 = vld [vmem:[%s1 + $0x14] sm:$0xf]
  %v58 = vld [vmem:[%s1 + $0x18] sm:$0xf]
  %v59 = vld [vmem:[%s1 + $0x1c] sm:$0xf]
  %v60 = vld [vmem:[%s1 + $0x20] sm:$0xf]
  %v61 = vld [vmem:[%s1 + $0x24] sm:$0xf]
  %v62 = vld [vmem:[%s1 + $0x28] sm:$0xf]
  %v63 = vld [vmem:[%s1 + $0x2c] sm:$0xf]
  %v64 = vld [vmem:[%s1 + $0x30] sm:$0xf]
  %v65 = vld [vmem:[%s1 + $0x34] sm:$0xf]
  %v66 = vld [vmem:[%s1 + $0x38] sm:$0xf]
  %v67 = vld [vmem:[%s1 + $0x3c] sm:$0xf]
  %v68 = vld [vmem:[%s1 + $0x40] sm:$0xf]
  %v69 = vld [vmem:[%s1 + $0x44] sm:$0xf]
  %v70 = vld [vmem:[%s1 + $0x48] sm:$0xf]
  %v71 = vld [vmem:[%s1 + $0x4c] sm:$0xf]
  %v72 = vld [vmem:[%s1 + $0x50] sm:$0xf]
  %v73 = vld [vmem:[%s1 + $0x54] sm:$0xf]
  %v74 = vld [vmem:[%s1 + $0x58] sm:$0xf]
  %v75 = vld [vmem:[%s1 + $0x5c] sm:$0xf]
  %v76 = vld [vmem:[%s1 + $0x60] sm:$0xf]
  %v77 = vld [vmem:[%s1 + $0x64] sm:$0xf]
  %v78 = vld [vmem:[%s1 + $0x68] sm:$0xf]
  %v79 = vld [vmem:[%s1 + $0x6c] sm:$0xf]
  %v80 = vld [vmem:[%s1 + $0x70] sm:$0xf]
  %v81 = vld [vmem:[%s1 + $0x74] sm:$0xf]
  %v82 = vld [vmem:[%s1 + $0x78] sm:$0xf]
  %v83 = vld [vmem:[%s1 + $0x7c] sm:$0xf]
  %v84 = vld [vmem:[%s2] sm:$0x3]
  %v85 = vld [vmem:[%s2 + $0x2] sm:$0x3]
  %v86 = vld [vmem:[%s2 + $0x4] sm:$0x3]
  %v87 = vld [vmem:[%s2 + $0x6] sm:$0x3]
  %v88 = vld [vmem:[%s2 + $0x8] sm:$0x3]
  %v89 = vld [vmem:[%s2 + $0xa] sm:$0x3]
  %v90 = vld [vmem:[%s2 + $0xc] sm:$0x3]
  %v91 = vld [vmem:[%s2 + $0xe] sm:$0x3]
  %v92 = vld [vmem:[%s2 + $0x10] sm:$0x3]
  %v93 = vld [vmem:[%s2 + $0x12] sm:$0x3]
  %v94 = vld [vmem:[%s2 + $0x14] sm:$0x3]
  %v95 = vld [vmem:[%s2 + $0x16] sm:$0x3]
  %v96 = vld [vmem:[%s2 + $0x18] sm:$0x3]
  %v97 = vld [vmem:[%s2 + $0x1a] sm:$0x3]
  %v98 = vld [vmem:[%s2 + $0x1c] sm:$0x3]
  %v99 = vld [vmem:[%s2 + $0x1e] sm:$0x3]
  %v100 = vld [vmem:[%s2 + $0x20] sm:$0x3]
  %v101 = vld [vmem:[%s2 + $0x22] sm:$0x3]
  %v102 = vld [vmem:[%s2 + $0x24] sm:$0x3]
  %v103 = vld [vmem:[%s2 + $0x26] sm:$0x3]
  %v104 = vld [vmem:[%s2 + $0x28] sm:$0x3]
  %v105 = vld [vmem:[%s2 + $0x2a] sm:$0x3]
  %v106 = vld [vmem:[%s2 + $0x2c] sm:$0x3]
  %v107 = vld [vmem:[%s2 + $0x2e] sm:$0x3]
  %v108 = vld [vmem:[%s2 + $0x30] sm:$0x3]
  %v109 = vld [vmem:[%s2 + $0x32] sm:$0x3]
  %v110 = vld [vmem:[%s2 + $0x34] sm:$0x3]
  %v111 = vld [vmem:[%s2 + $0x36] sm:$0x3]
  %v112 = vld [vmem:[%s2 + $0x38] sm:$0x3]
  %v113 = vld [vmem:[%s2 + $0x3a] sm:$0x3]
  %v114 = vld [vmem:[%s2 + $0x3c] sm:$0x3]
  %v115 = vld [vmem:[%s2 + $0x3e] sm:$0x3]
  %v116 = vld [vmem:[%s3] sm:$0x3]
  %v117 = vld [vmem:[%s3 + $0x2] sm:$0x3]
  %v118 = vld [vmem:[%s3 + $0x4] sm:$0x3]
  %v119 = vld [vmem:[%s3 + $0x6] sm:$0x3]
  %v120 = vld [vmem:[%s3 + $0x8] sm:$0x3]
  %v121 = vld [vmem:[%s3 + $0xa] sm:$0x3]
  %v122 = vld [vmem:[%s3 + $0xc] sm:$0x3]
  %v123 = vld [vmem:[%s3 + $0xe] sm:$0x3]
  %v124 = vld [vmem:[%s3 + $0x10] sm:$0x3]
  %v125 = vld [vmem:[%s3 + $0x12] sm:$0x3]
  %v126 = vld [vmem:[%s3 + $0x14] sm:$0x3]
  %v127 = vld [vmem:[%s3 + $0x16] sm:$0x3]
  %v128 = vld [vmem:[%s3 + $0x18] sm:$0x3]
  %v129 = vld [vmem:[%s3 + $0x1a] sm:$0x3]
  %v130 = vld [vmem:[%s3 + $0x1c] sm:$0x3]
  %v131 = vld [vmem:[%s3 + $0x1e] sm:$0x3]
  %v132 = vld [vmem:[%s3 + $0x20] sm:$0x3]
  %v133 = vld [vmem:[%s3 + $0x22] sm:$0x3]
  %v134 = vld [vmem:[%s3 + $0x24] sm:$0x3]
  %v135 = vld [vmem:[%s3 + $0x26] sm:$0x3]
  %v136 = vld [vmem:[%s3 + $0x28] sm:$0x3]
  %v137 = vld [vmem:[%s3 + $0x2a] sm:$0x3]
  %v138 = vld [vmem:[%s3 + $0x2c] sm:$0x3]
  %v139 = vld [vmem:[%s3 + $0x2e] sm:$0x3]
  %v140 = vld [vmem:[%s3 + $0x30] sm:$0x3]
  %v141 = vld [vmem:[%s3 + $0x32] sm:$0x3]
  %v142 = vld [vmem:[%s3 + $0x34] sm:$0x3]
  %v143 = vld [vmem:[%s3 + $0x36] sm:$0x3]
  %v144 = vld [vmem:[%s3 + $0x38] sm:$0x3]
  %v145 = vld [vmem:[%s3 + $0x3a] sm:$0x3]
  %v146 = vld [vmem:[%s3 + $0x3c] sm:$0x3]
  %v147 = vld [vmem:[%s3 + $0x3e] sm:$0x3]
  %vm148 = vcmask 31744
  %v150 = vsel %vm148, %v20, 0
  %vm152 = vcmask 1041408
  %v154 = vsel %vm152, %v84, 0
  %156 = vmatpush.bf16.msra.mxu0 0
  %157 = vmatpush.bf16.msra.mxu0 0
  %158 = vmatpush.bf16.msra.mxu0 0
  %159 = vmatpush.bf16.msra.mxu0 0
  %160 = vmatpush.bf16.msra.mxu0 0
  %161 = vmatpush.bf16.msra.mxu0 0
  %162 = vmatpush.bf16.msra.mxu0 0
  %163 = vmatpush.bf16.msra.mxu0 %v154
  %164 = vmatmul.bf16.gmra.mxu0 %v150
  %v165 = vpop.f32.mrf.mxu0
  %v166 = vadd.f32 0.0, %v165
  %v167 = vpop.f32.mrf.mxu0
  %168 = vdwg.mxu0
  %v170 = vsel %vm148, %v21, 0
  %v173 = vsel %vm152, %v85, 0
  %175 = vmatpush.bf16.msra.mxu0 0
  %176 = vmatpush.bf16.msra.mxu0 0
  %177 = vmatpush.bf16.msra.mxu0 0
  %178 = vmatpush.bf16.msra.mxu0 0
  %179 = vmatpush.bf16.msra.mxu0 0
  %180 = vmatpush.bf16.msra.mxu0 0
  %181 = vmatpush.bf16.msra.mxu0 0
  %182 = vmatpush.bf16.msra.mxu0 %v173
  %183 = vmatmul.bf16.gmra.mxu0 %v170
  %v184 = vpop.f32.mrf.mxu0
  %v185 = vadd.f32 0.0, %v184
  %v186 = vpop.f32.mrf.mxu0
  %187 = vdwg.mxu0
  %v189 = vsel %vm148, %v22, 0
  %v192 = vsel %vm152, %v86, 0
  %194 = vmatpush.bf16.msra.mxu0 0
  %195 = vmatpush.bf16.msra.mxu0 0
  %196 = vmatpush.bf16.msra.mxu0 0
  %197 = vmatpush.bf16.msra.mxu0 0
  %198 = vmatpush.bf16.msra.mxu0 0
  %199 = vmatpush.bf16.msra.mxu0 0
  %200 = vmatpush.bf16.msra.mxu0 0
  %201 = vmatpush.bf16.msra.mxu0 %v192
  %202 = vmatmul.bf16.gmra.mxu0 %v189
  %v203 = vpop.f32.mrf.mxu0
  %v204 = vadd.f32 0.0, %v203
  %v205 = vpop.f32.mrf.mxu0
  %206 = vdwg.mxu0
  %v208 = vsel %vm148, %v23, 0
  %v211 = vsel %vm152, %v87, 0
  %213 = vmatpush.bf16.msra.mxu0 0
  %214 = vmatpush.bf16.msra.mxu0 0
  %215 = vmatpush.bf16.msra.mxu0 0
  %216 = vmatpush.bf16.msra.mxu0 0
  %217 = vmatpush.bf16.msra.mxu0 0
  %218 = vmatpush.bf16.msra.mxu0 0
  %219 = vmatpush.bf16.msra.mxu0 0
  %220 = vmatpush.bf16.msra.mxu0 %v211
  %221 = vmatmul.bf16.gmra.mxu0 %v208
  %v222 = vpop.f32.mrf.mxu0
  %v223 = vadd.f32 0.0, %v222
  %v224 = vpop.f32.mrf.mxu0
  %225 = vdwg.mxu0
  %v227 = vsel %vm148, %v24, 0
  %v230 = vsel %vm152, %v88, 0
  %232 = vmatpush.bf16.msra.mxu0 0
  %233 = vmatpush.bf16.msra.mxu0 0
  %234 = vmatpush.bf16.msra.mxu0 0
  %235 = vmatpush.bf16.msra.mxu0 0
  %236 = vmatpush.bf16.msra.mxu0 0
  %237 = vmatpush.bf16.msra.mxu0 0
  %238 = vmatpush.bf16.msra.mxu0 0
  %239 = vmatpush.bf16.msra.mxu0 %v230
  %240 = vmatmul.bf16.gmra.mxu0 %v227
  %v241 = vpop.f32.mrf.mxu0
  %v242 = vadd.f32 0.0, %v241
  %v243 = vpop.f32.mrf.mxu0
  %244 = vdwg.mxu0
  %v246 = vsel %vm148, %v25, 0
  %v249 = vsel %vm152, %v89, 0
  %251 = vmatpush.bf16.msra.mxu0 0
  %252 = vmatpush.bf16.msra.mxu0 0
  %253 = vmatpush.bf16.msra.mxu0 0
  %254 = vmatpush.bf16.msra.mxu0 0
  %255 = vmatpush.bf16.msra.mxu0 0
  %256 = vmatpush.bf16.msra.mxu0 0
  %257 = vmatpush.bf16.msra.mxu0 0
  %258 = vmatpush.bf16.msra.mxu0 %v249
  %259 = vmatmul.bf16.gmra.mxu0 %v246
  %v260 = vpop.f32.mrf.mxu0
  %v261 = vadd.f32 0.0, %v260
  %v262 = vpop.f32.mrf.mxu0
  %263 = vdwg.mxu0
  %v265 = vsel %vm148, %v26, 0
  %v268 = vsel %vm152, %v90, 0
  %270 = vmatpush.bf16.msra.mxu0 0
  %271 = vmatpush.bf16.msra.mxu0 0
  %272 = vmatpush.bf16.msra.mxu0 0
  %273 = vmatpush.bf16.msra.mxu0 0
  %274 = vmatpush.bf16.msra.mxu0 0
  %275 = vmatpush.bf16.msra.mxu0 0
  %276 = vmatpush.bf16.msra.mxu0 0
  %277 = vmatpush.bf16.msra.mxu0 %v268
  %278 = vmatmul.bf16.gmra.mxu0 %v265
  %v279 = vpop.f32.mrf.mxu0
  %v280 = vadd.f32 0.0, %v279
  %v281 = vpop.f32.mrf.mxu0
  %282 = vdwg.mxu0
  %v284 = vsel %vm148, %v27, 0
  %v287 = vsel %vm152, %v91, 0
  %289 = vmatpush.bf16.msra.mxu0 0
  %290 = vmatpush.bf16.msra.mxu0 0
  %291 = vmatpush.bf16.msra.mxu0 0
  %292 = vmatpush.bf16.msra.mxu0 0
  %293 = vmatpush.bf16.msra.mxu0 0
  %294 = vmatpush.bf16.msra.mxu0 0
  %295 = vmatpush.bf16.msra.mxu0 0
  %296 = vmatpush.bf16.msra.mxu0 %v287
  %297 = vmatmul.bf16.gmra.mxu0 %v284
  %v298 = vpop.f32.mrf.mxu0
  %v299 = vadd.f32 0.0, %v298
  %v300 = vpop.f32.mrf.mxu0
  %301 = vdwg.mxu0
  %v303 = vsel %vm148, %v28, 0
  %v306 = vsel %vm152, %v92, 0
  %308 = vmatpush.bf16.msra.mxu0 0
  %309 = vmatpush.bf16.msra.mxu0 0
  %310 = vmatpush.bf16.msra.mxu0 0
  %311 = vmatpush.bf16.msra.mxu0 0
  %312 = vmatpush.bf16.msra.mxu0 0
  %313 = vmatpush.bf16.msra.mxu0 0
  %314 = vmatpush.bf16.msra.mxu0 0
  %315 = vmatpush.bf16.msra.mxu0 %v306
  %316 = vmatmul.bf16.gmra.mxu0 %v303
  %v317 = vpop.f32.mrf.mxu0
  %v318 = vadd.f32 0.0, %v317
  %v319 = vpop.f32.mrf.mxu0
  %320 = vdwg.mxu0
  %v322 = vsel %vm148, %v29, 0
  %v325 = vsel %vm152, %v93, 0
  %327 = vmatpush.bf16.msra.mxu0 0
  %328 = vmatpush.bf16.msra.mxu0 0
  %329 = vmatpush.bf16.msra.mxu0 0
  %330 = vmatpush.bf16.msra.mxu0 0
  %331 = vmatpush.bf16.msra.mxu0 0
  %332 = vmatpush.bf16.msra.mxu0 0
  %333 = vmatpush.bf16.msra.mxu0 0
  %334 = vmatpush.bf16.msra.mxu0 %v325
  %335 = vmatmul.bf16.gmra.mxu0 %v322
  %v336 = vpop.f32.mrf.mxu0
  %v337 = vadd.f32 0.0, %v336
  %v338 = vpop.f32.mrf.mxu0
  %339 = vdwg.mxu0
  %v341 = vsel %vm148, %v30, 0
  %v344 = vsel %vm152, %v94, 0
  %346 = vmatpush.bf16.msra.mxu0 0
  %347 = vmatpush.bf16.msra.mxu0 0
  %348 = vmatpush.bf16.msra.mxu0 0
  %349 = vmatpush.bf16.msra.mxu0 0
  %350 = vmatpush.bf16.msra.mxu0 0
  %351 = vmatpush.bf16.msra.mxu0 0
  %352 = vmatpush.bf16.msra.mxu0 0
  %353 = vmatpush.bf16.msra.mxu0 %v344
  %354 = vmatmul.bf16.gmra.mxu0 %v341
  %v355 = vpop.f32.mrf.mxu0
  %v356 = vadd.f32 0.0, %v355
  %v357 = vpop.f32.mrf.mxu0
  %358 = vdwg.mxu0
  %v360 = vsel %vm148, %v31, 0
  %v363 = vsel %vm152, %v95, 0
  %365 = vmatpush.bf16.msra.mxu0 0
  %366 = vmatpush.bf16.msra.mxu0 0
  %367 = vmatpush.bf16.msra.mxu0 0
  %368 = vmatpush.bf16.msra.mxu0 0
  %369 = vmatpush.bf16.msra.mxu0 0
  %370 = vmatpush.bf16.msra.mxu0 0
  %371 = vmatpush.bf16.msra.mxu0 0
  %372 = vmatpush.bf16.msra.mxu0 %v363
  %373 = vmatmul.bf16.gmra.mxu0 %v360
  %v374 = vpop.f32.mrf.mxu0
  %v375 = vadd.f32 0.0, %v374
  %v376 = vpop.f32.mrf.mxu0
  %377 = vdwg.mxu0
  %v379 = vsel %vm148, %v32, 0
  %v382 = vsel %vm152, %v96, 0
  %384 = vmatpush.bf16.msra.mxu0 0
  %385 = vmatpush.bf16.msra.mxu0 0
  %386 = vmatpush.bf16.msra.mxu0 0
  %387 = vmatpush.bf16.msra.mxu0 0
  %388 = vmatpush.bf16.msra.mxu0 0
  %389 = vmatpush.bf16.msra.mxu0 0
  %390 = vmatpush.bf16.msra.mxu0 0
  %391 = vmatpush.bf16.msra.mxu0 %v382
  %392 = vmatmul.bf16.gmra.mxu0 %v379
  %v393 = vpop.f32.mrf.mxu0
  %v394 = vadd.f32 0.0, %v393
  %v395 = vpop.f32.mrf.mxu0
  %396 = vdwg.mxu0
  %v398 = vsel %vm148, %v33, 0
  %v401 = vsel %vm152, %v97, 0
  %403 = vmatpush.bf16.msra.mxu0 0
  %404 = vmatpush.bf16.msra.mxu0 0
  %405 = vmatpush.bf16.msra.mxu0 0
  %406 = vmatpush.bf16.msra.mxu0 0
  %407 = vmatpush.bf16.msra.mxu0 0
  %408 = vmatpush.bf16.msra.mxu0 0
  %409 = vmatpush.bf16.msra.mxu0 0
  %410 = vmatpush.bf16.msra.mxu0 %v401
  %411 = vmatmul.bf16.gmra.mxu0 %v398
  %v412 = vpop.f32.mrf.mxu0
  %v413 = vadd.f32 0.0, %v412
  %v414 = vpop.f32.mrf.mxu0
  %415 = vdwg.mxu0
  %v417 = vsel %vm148, %v34, 0
  %v420 = vsel %vm152, %v98, 0
  %422 = vmatpush.bf16.msra.mxu0 0
  %423 = vmatpush.bf16.msra.mxu0 0
  %424 = vmatpush.bf16.msra.mxu0 0
  %425 = vmatpush.bf16.msra.mxu0 0
  %426 = vmatpush.bf16.msra.mxu0 0
  %427 = vmatpush.bf16.msra.mxu0 0
  %428 = vmatpush.bf16.msra.mxu0 0
  %429 = vmatpush.bf16.msra.mxu0 %v420
  %430 = vmatmul.bf16.gmra.mxu0 %v417
  %v431 = vpop.f32.mrf.mxu0
  %v432 = vadd.f32 0.0, %v431
  %v433 = vpop.f32.mrf.mxu0
  %434 = vdwg.mxu0
  %v436 = vsel %vm148, %v35, 0
  %v439 = vsel %vm152, %v99, 0
  %441 = vmatpush.bf16.msra.mxu0 0
  %442 = vmatpush.bf16.msra.mxu0 0
  %443 = vmatpush.bf16.msra.mxu0 0
  %444 = vmatpush.bf16.msra.mxu0 0
  %445 = vmatpush.bf16.msra.mxu0 0
  %446 = vmatpush.bf16.msra.mxu0 0
  %447 = vmatpush.bf16.msra.mxu0 0
  %448 = vmatpush.bf16.msra.mxu0 %v439
  %449 = vmatmul.bf16.gmra.mxu0 %v436
  %v450 = vpop.f32.mrf.mxu0
  %v451 = vadd.f32 0.0, %v450
  %v452 = vpop.f32.mrf.mxu0
  %453 = vdwg.mxu0
  %v455 = vsel %vm148, %v36, 0
  %v458 = vsel %vm152, %v100, 0
  %460 = vmatpush.bf16.msra.mxu0 0
  %461 = vmatpush.bf16.msra.mxu0 0
  %462 = vmatpush.bf16.msra.mxu0 0
  %463 = vmatpush.bf16.msra.mxu0 0
  %464 = vmatpush.bf16.msra.mxu0 0
  %465 = vmatpush.bf16.msra.mxu0 0
  %466 = vmatpush.bf16.msra.mxu0 0
  %467 = vmatpush.bf16.msra.mxu0 %v458
  %468 = vmatmul.bf16.gmra.mxu0 %v455
  %v469 = vpop.f32.mrf.mxu0
  %v470 = vadd.f32 0.0, %v469
  %v471 = vpop.f32.mrf.mxu0
  %472 = vdwg.mxu0
  %v474 = vsel %vm148, %v37, 0
  %v477 = vsel %vm152, %v101, 0
  %479 = vmatpush.bf16.msra.mxu0 0
  %480 = vmatpush.bf16.msra.mxu0 0
  %481 = vmatpush.bf16.msra.mxu0 0
  %482 = vmatpush.bf16.msra.mxu0 0
  %483 = vmatpush.bf16.msra.mxu0 0
  %484 = vmatpush.bf16.msra.mxu0 0
  %485 = vmatpush.bf16.msra.mxu0 0
  %486 = vmatpush.bf16.msra.mxu0 %v477
  %487 = vmatmul.bf16.gmra.mxu0 %v474
  %v488 = vpop.f32.mrf.mxu0
  %v489 = vadd.f32 0.0, %v488
  %v490 = vpop.f32.mrf.mxu0
  %491 = vdwg.mxu0
  %v493 = vsel %vm148, %v38, 0
  %v496 = vsel %vm152, %v102, 0
  %498 = vmatpush.bf16.msra.mxu0 0
  %499 = vmatpush.bf16.msra.mxu0 0
  %500 = vmatpush.bf16.msra.mxu0 0
  %501 = vmatpush.bf16.msra.mxu0 0
  %502 = vmatpush.bf16.msra.mxu0 0
  %503 = vmatpush.bf16.msra.mxu0 0
  %504 = vmatpush.bf16.msra.mxu0 0
  %505 = vmatpush.bf16.msra.mxu0 %v496
  %506 = vmatmul.bf16.gmra.mxu0 %v493
  %v507 = vpop.f32.mrf.mxu0
  %v508 = vadd.f32 0.0, %v507
  %v509 = vpop.f32.mrf.mxu0
  %510 = vdwg.mxu0
  %v512 = vsel %vm148, %v39, 0
  %v515 = vsel %vm152, %v103, 0
  %517 = vmatpush.bf16.msra.mxu0 0
  %518 = vmatpush.bf16.msra.mxu0 0
  %519 = vmatpush.bf16.msra.mxu0 0
  %520 = vmatpush.bf16.msra.mxu0 0
  %521 = vmatpush.bf16.msra.mxu0 0
  %522 = vmatpush.bf16.msra.mxu0 0
  %523 = vmatpush.bf16.msra.mxu0 0
  %524 = vmatpush.bf16.msra.mxu0 %v515
  %525 = vmatmul.bf16.gmra.mxu0 %v512
  %v526 = vpop.f32.mrf.mxu0
  %v527 = vadd.f32 0.0, %v526
  %v528 = vpop.f32.mrf.mxu0
  %529 = vdwg.mxu0
  %v531 = vsel %vm148, %v40, 0
  %v534 = vsel %vm152, %v104, 0
  %536 = vmatpush.bf16.msra.mxu0 0
  %537 = vmatpush.bf16.msra.mxu0 0
  %538 = vmatpush.bf16.msra.mxu0 0
  %539 = vmatpush.bf16.msra.mxu0 0
  %540 = vmatpush.bf16.msra.mxu0 0
  %541 = vmatpush.bf16.msra.mxu0 0
  %542 = vmatpush.bf16.msra.mxu0 0
  %543 = vmatpush.bf16.msra.mxu0 %v534
  %544 = vmatmul.bf16.gmra.mxu0 %v531
  %v545 = vpop.f32.mrf.mxu0
  %v546 = vadd.f32 0.0, %v545
  %v547 = vpop.f32.mrf.mxu0
  %548 = vdwg.mxu0
  %v550 = vsel %vm148, %v41, 0
  %v553 = vsel %vm152, %v105, 0
  %555 = vmatpush.bf16.msra.mxu0 0
  %556 = vmatpush.bf16.msra.mxu0 0
  %557 = vmatpush.bf16.msra.mxu0 0
  %558 = vmatpush.bf16.msra.mxu0 0
  %559 = vmatpush.bf16.msra.mxu0 0
  %560 = vmatpush.bf16.msra.mxu0 0
  %561 = vmatpush.bf16.msra.mxu0 0
  %562 = vmatpush.bf16.msra.mxu0 %v553
  %563 = vmatmul.bf16.gmra.mxu0 %v550
  %v564 = vpop.f32.mrf.mxu0
  %v565 = vadd.f32 0.0, %v564
  %v566 = vpop.f32.mrf.mxu0
  %567 = vdwg.mxu0
  %v569 = vsel %vm148, %v42, 0
  %v572 = vsel %vm152, %v106, 0
  %574 = vmatpush.bf16.msra.mxu0 0
  %575 = vmatpush.bf16.msra.mxu0 0
  %576 = vmatpush.bf16.msra.mxu0 0
  %577 = vmatpush.bf16.msra.mxu0 0
  %578 = vmatpush.bf16.msra.mxu0 0
  %579 = vmatpush.bf16.msra.mxu0 0
  %580 = vmatpush.bf16.msra.mxu0 0
  %581 = vmatpush.bf16.msra.mxu0 %v572
  %582 = vmatmul.bf16.gmra.mxu0 %v569
  %v583 = vpop.f32.mrf.mxu0
  %v584 = vadd.f32 0.0, %v583
  %v585 = vpop.f32.mrf.mxu0
  %586 = vdwg.mxu0
  %v588 = vsel %vm148, %v43, 0
  %v591 = vsel %vm152, %v107, 0
  %593 = vmatpush.bf16.msra.mxu0 0
  %594 = vmatpush.bf16.msra.mxu0 0
  %595 = vmatpush.bf16.msra.mxu0 0
  %596 = vmatpush.bf16.msra.mxu0 0
  %597 = vmatpush.bf16.msra.mxu0 0
  %598 = vmatpush.bf16.msra.mxu0 0
  %599 = vmatpush.bf16.msra.mxu0 0
  %600 = vmatpush.bf16.msra.mxu0 %v591
  %601 = vmatmul.bf16.gmra.mxu0 %v588
  %v602 = vpop.f32.mrf.mxu0
  %v603 = vadd.f32 0.0, %v602
  %v604 = vpop.f32.mrf.mxu0
  %605 = vdwg.mxu0
  %v607 = vsel %vm148, %v44, 0
  %v610 = vsel %vm152, %v108, 0
  %612 = vmatpush.bf16.msra.mxu0 0
  %613 = vmatpush.bf16.msra.mxu0 0
  %614 = vmatpush.bf16.msra.mxu0 0
  %615 = vmatpush.bf16.msra.mxu0 0
  %616 = vmatpush.bf16.msra.mxu0 0
  %617 = vmatpush.bf16.msra.mxu0 0
  %618 = vmatpush.bf16.msra.mxu0 0
  %619 = vmatpush.bf16.msra.mxu0 %v610
  %620 = vmatmul.bf16.gmra.mxu0 %v607
  %v621 = vpop.f32.mrf.mxu0
  %v622 = vadd.f32 0.0, %v621
  %v623 = vpop.f32.mrf.mxu0
  %624 = vdwg.mxu0
  %v626 = vsel %vm148, %v45, 0
  %v629 = vsel %vm152, %v109, 0
  %631 = vmatpush.bf16.msra.mxu0 0
  %632 = vmatpush.bf16.msra.mxu0 0
  %633 = vmatpush.bf16.msra.mxu0 0
  %634 = vmatpush.bf16.msra.mxu0 0
  %635 = vmatpush.bf16.msra.mxu0 0
  %636 = vmatpush.bf16.msra.mxu0 0
  %637 = vmatpush.bf16.msra.mxu0 0
  %638 = vmatpush.bf16.msra.mxu0 %v629
  %639 = vmatmul.bf16.gmra.mxu0 %v626
  %v640 = vpop.f32.mrf.mxu0
  %v641 = vadd.f32 0.0, %v640
  %v642 = vpop.f32.mrf.mxu0
  %643 = vdwg.mxu0
  %v645 = vsel %vm148, %v46, 0
  %v648 = vsel %vm152, %v110, 0
  %650 = vmatpush.bf16.msra.mxu0 0
  %651 = vmatpush.bf16.msra.mxu0 0
  %652 = vmatpush.bf16.msra.mxu0 0
  %653 = vmatpush.bf16.msra.mxu0 0
  %654 = vmatpush.bf16.msra.mxu0 0
  %655 = vmatpush.bf16.msra.mxu0 0
  %656 = vmatpush.bf16.msra.mxu0 0
  %657 = vmatpush.bf16.msra.mxu0 %v648
  %658 = vmatmul.bf16.gmra.mxu0 %v645
  %v659 = vpop.f32.mrf.mxu0
  %v660 = vadd.f32 0.0, %v659
  %v661 = vpop.f32.mrf.mxu0
  %662 = vdwg.mxu0
  %v664 = vsel %vm148, %v47, 0
  %v667 = vsel %vm152, %v111, 0
  %669 = vmatpush.bf16.msra.mxu0 0
  %670 = vmatpush.bf16.msra.mxu0 0
  %671 = vmatpush.bf16.msra.mxu0 0
  %672 = vmatpush.bf16.msra.mxu0 0
  %673 = vmatpush.bf16.msra.mxu0 0
  %674 = vmatpush.bf16.msra.mxu0 0
  %675 = vmatpush.bf16.msra.mxu0 0
  %676 = vmatpush.bf16.msra.mxu0 %v667
  %677 = vmatmul.bf16.gmra.mxu0 %v664
  %v678 = vpop.f32.mrf.mxu0
  %v679 = vadd.f32 0.0, %v678
  %v680 = vpop.f32.mrf.mxu0
  %681 = vdwg.mxu0
  %v683 = vsel %vm148, %v48, 0
  %v686 = vsel %vm152, %v112, 0
  %688 = vmatpush.bf16.msra.mxu0 0
  %689 = vmatpush.bf16.msra.mxu0 0
  %690 = vmatpush.bf16.msra.mxu0 0
  %691 = vmatpush.bf16.msra.mxu0 0
  %692 = vmatpush.bf16.msra.mxu0 0
  %693 = vmatpush.bf16.msra.mxu0 0
  %694 = vmatpush.bf16.msra.mxu0 0
  %695 = vmatpush.bf16.msra.mxu0 %v686
  %696 = vmatmul.bf16.gmra.mxu0 %v683
  %v697 = vpop.f32.mrf.mxu0
  %v698 = vadd.f32 0.0, %v697
  %v699 = vpop.f32.mrf.mxu0
  %700 = vdwg.mxu0
  %v702 = vsel %vm148, %v49, 0
  %v705 = vsel %vm152, %v113, 0
  %707 = vmatpush.bf16.msra.mxu0 0
  %708 = vmatpush.bf16.msra.mxu0 0
  %709 = vmatpush.bf16.msra.mxu0 0
  %710 = vmatpush.bf16.msra.mxu0 0
  %711 = vmatpush.bf16.msra.mxu0 0
  %712 = vmatpush.bf16.msra.mxu0 0
  %713 = vmatpush.bf16.msra.mxu0 0
  %714 = vmatpush.bf16.msra.mxu0 %v705
  %715 = vmatmul.bf16.gmra.mxu0 %v702
  %v716 = vpop.f32.mrf.mxu0
  %v717 = vadd.f32 0.0, %v716
  %v718 = vpop.f32.mrf.mxu0
  %719 = vdwg.mxu0
  %v721 = vsel %vm148, %v50, 0
  %v724 = vsel %vm152, %v114, 0
  %726 = vmatpush.bf16.msra.mxu0 0
  %727 = vmatpush.bf16.msra.mxu0 0
  %728 = vmatpush.bf16.msra.mxu0 0
  %729 = vmatpush.bf16.msra.mxu0 0
  %730 = vmatpush.bf16.msra.mxu0 0
  %731 = vmatpush.bf16.msra.mxu0 0
  %732 = vmatpush.bf16.msra.mxu0 0
  %733 = vmatpush.bf16.msra.mxu0 %v724
  %734 = vmatmul.bf16.gmra.mxu0 %v721
  %v735 = vpop.f32.mrf.mxu0
  %v736 = vadd.f32 0.0, %v735
  %v737 = vpop.f32.mrf.mxu0
  %738 = vdwg.mxu0
  %v740 = vsel %vm148, %v51, 0
  %v743 = vsel %vm152, %v115, 0
  %745 = vmatpush.bf16.msra.mxu0 0
  %746 = vmatpush.bf16.msra.mxu0 0
  %747 = vmatpush.bf16.msra.mxu0 0
  %748 = vmatpush.bf16.msra.mxu0 0
  %749 = vmatpush.bf16.msra.mxu0 0
  %750 = vmatpush.bf16.msra.mxu0 0
  %751 = vmatpush.bf16.msra.mxu0 0
  %752 = vmatpush.bf16.msra.mxu0 %v743
  %753 = vmatmul.bf16.gmra.mxu0 %v740
  %v754 = vpop.f32.mrf.mxu0
  %v755 = vadd.f32 0.0, %v754
  %v756 = vpop.f32.mrf.mxu0
  %757 = vdwg.mxu0
  %v759 = vsel %vm148, %v52, 0
  %v762 = vsel %vm152, %v116, 0
  %764 = vmatpush.bf16.msra.mxu0 0
  %765 = vmatpush.bf16.msra.mxu0 0
  %766 = vmatpush.bf16.msra.mxu0 0
  %767 = vmatpush.bf16.msra.mxu0 0
  %768 = vmatpush.bf16.msra.mxu0 0
  %769 = vmatpush.bf16.msra.mxu0 0
  %770 = vmatpush.bf16.msra.mxu0 0
  %771 = vmatpush.bf16.msra.mxu0 %v762
  %772 = vmatmul.bf16.gmra.mxu0 %v759
  %v773 = vpop.f32.mrf.mxu0
  %v774 = vadd.f32 0.0, %v773
  %v775 = vpop.f32.mrf.mxu0
  %776 = vdwg.mxu0
  %v778 = vsel %vm148, %v53, 0
  %v781 = vsel %vm152, %v117, 0
  %783 = vmatpush.bf16.msra.mxu0 0
  %784 = vmatpush.bf16.msra.mxu0 0
  %785 = vmatpush.bf16.msra.mxu0 0
  %786 = vmatpush.bf16.msra.mxu0 0
  %787 = vmatpush.bf16.msra.mxu0 0
  %788 = vmatpush.bf16.msra.mxu0 0
  %789 = vmatpush.bf16.msra.mxu0 0
  %790 = vmatpush.bf16.msra.mxu0 %v781
  %791 = vmatmul.bf16.gmra.mxu0 %v778
  %v792 = vpop.f32.mrf.mxu0
  %v793 = vadd.f32 0.0, %v792
  %v794 = vpop.f32.mrf.mxu0
  %795 = vdwg.mxu0
  %v797 = vsel %vm148, %v54, 0
  %v800 = vsel %vm152, %v118, 0
  %802 = vmatpush.bf16.msra.mxu0 0
  %803 = vmatpush.bf16.msra.mxu0 0
  %804 = vmatpush.bf16.msra.mxu0 0
  %805 = vmatpush.bf16.msra.mxu0 0
  %806 = vmatpush.bf16.msra.mxu0 0
  %807 = vmatpush.bf16.msra.mxu0 0
  %808 = vmatpush.bf16.msra.mxu0 0
  %809 = vmatpush.bf16.msra.mxu0 %v800
  %810 = vmatmul.bf16.gmra.mxu0 %v797
  %v811 = vpop.f32.mrf.mxu0
  %v812 = vadd.f32 0.0, %v811
  %v813 = vpop.f32.mrf.mxu0
  %814 = vdwg.mxu0
  %v816 = vsel %vm148, %v55, 0
  %v819 = vsel %vm152, %v119, 0
  %821 = vmatpush.bf16.msra.mxu0 0
  %822 = vmatpush.bf16.msra.mxu0 0
  %823 = vmatpush.bf16.msra.mxu0 0
  %824 = vmatpush.bf16.msra.mxu0 0
  %825 = vmatpush.bf16.msra.mxu0 0
  %826 = vmatpush.bf16.msra.mxu0 0
  %827 = vmatpush.bf16.msra.mxu0 0
  %828 = vmatpush.bf16.msra.mxu0 %v819
  %829 = vmatmul.bf16.gmra.mxu0 %v816
  %v830 = vpop.f32.mrf.mxu0
  %v831 = vadd.f32 0.0, %v830
  %v832 = vpop.f32.mrf.mxu0
  %833 = vdwg.mxu0
  %v835 = vsel %vm148, %v56, 0
  %v838 = vsel %vm152, %v120, 0
  %840 = vmatpush.bf16.msra.mxu0 0
  %841 = vmatpush.bf16.msra.mxu0 0
  %842 = vmatpush.bf16.msra.mxu0 0
  %843 = vmatpush.bf16.msra.mxu0 0
  %844 = vmatpush.bf16.msra.mxu0 0
  %845 = vmatpush.bf16.msra.mxu0 0
  %846 = vmatpush.bf16.msra.mxu0 0
  %847 = vmatpush.bf16.msra.mxu0 %v838
  %848 = vmatmul.bf16.gmra.mxu0 %v835
  %v849 = vpop.f32.mrf.mxu0
  %v850 = vadd.f32 0.0, %v849
  %v851 = vpop.f32.mrf.mxu0
  %852 = vdwg.mxu0
  %v854 = vsel %vm148, %v57, 0
  %v857 = vsel %vm152, %v121, 0
  %859 = vmatpush.bf16.msra.mxu0 0
  %860 = vmatpush.bf16.msra.mxu0 0
  %861 = vmatpush.bf16.msra.mxu0 0
  %862 = vmatpush.bf16.msra.mxu0 0
  %863 = vmatpush.bf16.msra.mxu0 0
  %864 = vmatpush.bf16.msra.mxu0 0
  %865 = vmatpush.bf16.msra.mxu0 0
  %866 = vmatpush.bf16.msra.mxu0 %v857
  %867 = vmatmul.bf16.gmra.mxu0 %v854
  %v868 = vpop.f32.mrf.mxu0
  %v869 = vadd.f32 0.0, %v868
  %v870 = vpop.f32.mrf.mxu0
  %871 = vdwg.mxu0
  %v873 = vsel %vm148, %v58, 0
  %v876 = vsel %vm152, %v122, 0
  %878 = vmatpush.bf16.msra.mxu0 0
  %879 = vmatpush.bf16.msra.mxu0 0
  %880 = vmatpush.bf16.msra.mxu0 0
  %881 = vmatpush.bf16.msra.mxu0 0
  %882 = vmatpush.bf16.msra.mxu0 0
  %883 = vmatpush.bf16.msra.mxu0 0
  %884 = vmatpush.bf16.msra.mxu0 0
  %885 = vmatpush.bf16.msra.mxu0 %v876
  %886 = vmatmul.bf16.gmra.mxu0 %v873
  %v887 = vpop.f32.mrf.mxu0
  %v888 = vadd.f32 0.0, %v887
  %v889 = vpop.f32.mrf.mxu0
  %890 = vdwg.mxu0
  %v892 = vsel %vm148, %v59, 0
  %v895 = vsel %vm152, %v123, 0
  %897 = vmatpush.bf16.msra.mxu0 0
  %898 = vmatpush.bf16.msra.mxu0 0
  %899 = vmatpush.bf16.msra.mxu0 0
  %900 = vmatpush.bf16.msra.mxu0 0
  %901 = vmatpush.bf16.msra.mxu0 0
  %902 = vmatpush.bf16.msra.mxu0 0
  %903 = vmatpush.bf16.msra.mxu0 0
  %904 = vmatpush.bf16.msra.mxu0 %v895
  %905 = vmatmul.bf16.gmra.mxu0 %v892
  %v906 = vpop.f32.mrf.mxu0
  %v907 = vadd.f32 0.0, %v906
  %v908 = vpop.f32.mrf.mxu0
  %909 = vdwg.mxu0
  %v911 = vsel %vm148, %v60, 0
  %v914 = vsel %vm152, %v124, 0
  %916 = vmatpush.bf16.msra.mxu0 0
  %917 = vmatpush.bf16.msra.mxu0 0
  %918 = vmatpush.bf16.msra.mxu0 0
  %919 = vmatpush.bf16.msra.mxu0 0
  %920 = vmatpush.bf16.msra.mxu0 0
  %921 = vmatpush.bf16.msra.mxu0 0
  %922 = vmatpush.bf16.msra.mxu0 0
  %923 = vmatpush.bf16.msra.mxu0 %v914
  %924 = vmatmul.bf16.gmra.mxu0 %v911
  %v925 = vpop.f32.mrf.mxu0
  %v926 = vadd.f32 0.0, %v925
  %v927 = vpop.f32.mrf.mxu0
  %928 = vdwg.mxu0
  %v930 = vsel %vm148, %v61, 0
  %v933 = vsel %vm152, %v125, 0
  %935 = vmatpush.bf16.msra.mxu0 0
  %936 = vmatpush.bf16.msra.mxu0 0
  %937 = vmatpush.bf16.msra.mxu0 0
  %938 = vmatpush.bf16.msra.mxu0 0
  %939 = vmatpush.bf16.msra.mxu0 0
  %940 = vmatpush.bf16.msra.mxu0 0
  %941 = vmatpush.bf16.msra.mxu0 0
  %942 = vmatpush.bf16.msra.mxu0 %v933
  %943 = vmatmul.bf16.gmra.mxu0 %v930
  %v944 = vpop.f32.mrf.mxu0
  %v945 = vadd.f32 0.0, %v944
  %v946 = vpop.f32.mrf.mxu0
  %947 = vdwg.mxu0
  %v949 = vsel %vm148, %v62, 0
  %v952 = vsel %vm152, %v126, 0
  %954 = vmatpush.bf16.msra.mxu0 0
  %955 = vmatpush.bf16.msra.mxu0 0
  %956 = vmatpush.bf16.msra.mxu0 0
  %957 = vmatpush.bf16.msra.mxu0 0
  %958 = vmatpush.bf16.msra.mxu0 0
  %959 = vmatpush.bf16.msra.mxu0 0
  %960 = vmatpush.bf16.msra.mxu0 0
  %961 = vmatpush.bf16.msra.mxu0 %v952
  %962 = vmatmul.bf16.gmra.mxu0 %v949
  %v963 = vpop.f32.mrf.mxu0
  %v964 = vadd.f32 0.0, %v963
  %v965 = vpop.f32.mrf.mxu0
  %966 = vdwg.mxu0
  %v968 = vsel %vm148, %v63, 0
  %v971 = vsel %vm152, %v127, 0
  %973 = vmatpush.bf16.msra.mxu0 0
  %974 = vmatpush.bf16.msra.mxu0 0
  %975 = vmatpush.bf16.msra.mxu0 0
  %976 = vmatpush.bf16.msra.mxu0 0
  %977 = vmatpush.bf16.msra.mxu0 0
  %978 = vmatpush.bf16.msra.mxu0 0
  %979 = vmatpush.bf16.msra.mxu0 0
  %980 = vmatpush.bf16.msra.mxu0 %v971
  %981 = vmatmul.bf16.gmra.mxu0 %v968
  %v982 = vpop.f32.mrf.mxu0
  %v983 = vadd.f32 0.0, %v982
  %v984 = vpop.f32.mrf.mxu0
  %985 = vdwg.mxu0
  %v987 = vsel %vm148, %v64, 0
  %v990 = vsel %vm152, %v128, 0
  %992 = vmatpush.bf16.msra.mxu0 0
  %993 = vmatpush.bf16.msra.mxu0 0
  %994 = vmatpush.bf16.msra.mxu0 0
  %995 = vmatpush.bf16.msra.mxu0 0
  %996 = vmatpush.bf16.msra.mxu0 0
  %997 = vmatpush.bf16.msra.mxu0 0
  %998 = vmatpush.bf16.msra.mxu0 0
  %999 = vmatpush.bf16.msra.mxu0 %v990
  %1000 = vmatmul.bf16.gmra.mxu0 %v987
  %v1001 = vpop.f32.mrf.mxu0
  %v1002 = vadd.f32 0.0, %v1001
  %v1003 = vpop.f32.mrf.mxu0
  %1004 = vdwg.mxu0
  %v1006 = vsel %vm148, %v65, 0
  %v1009 = vsel %vm152, %v129, 0
  %1011 = vmatpush.bf16.msra.mxu0 0
  %1012 = vmatpush.bf16.msra.mxu0 0
  %1013 = vmatpush.bf16.msra.mxu0 0
  %1014 = vmatpush.bf16.msra.mxu0 0
  %1015 = vmatpush.bf16.msra.mxu0 0
  %1016 = vmatpush.bf16.msra.mxu0 0
  %1017 = vmatpush.bf16.msra.mxu0 0
  %1018 = vmatpush.bf16.msra.mxu0 %v1009
  %1019 = vmatmul.bf16.gmra.mxu0 %v1006
  %v1020 = vpop.f32.mrf.mxu0
  %v1021 = vadd.f32 0.0, %v1020
  %v1022 = vpop.f32.mrf.mxu0
  %1023 = vdwg.mxu0
  %v1025 = vsel %vm148, %v66, 0
  %v1028 = vsel %vm152, %v130, 0
  %1030 = vmatpush.bf16.msra.mxu0 0
  %1031 = vmatpush.bf16.msra.mxu0 0
  %1032 = vmatpush.bf16.msra.mxu0 0
  %1033 = vmatpush.bf16.msra.mxu0 0
  %1034 = vmatpush.bf16.msra.mxu0 0
  %1035 = vmatpush.bf16.msra.mxu0 0
  %1036 = vmatpush.bf16.msra.mxu0 0
  %1037 = vmatpush.bf16.msra.mxu0 %v1028
  %1038 = vmatmul.bf16.gmra.mxu0 %v1025
  %v1039 = vpop.f32.mrf.mxu0
  %v1040 = vadd.f32 0.0, %v1039
  %v1041 = vpop.f32.mrf.mxu0
  %1042 = vdwg.mxu0
  %v1044 = vsel %vm148, %v67, 0
  %v1047 = vsel %vm152, %v131, 0
  %1049 = vmatpush.bf16.msra.mxu0 0
  %1050 = vmatpush.bf16.msra.mxu0 0
  %1051 = vmatpush.bf16.msra.mxu0 0
  %1052 = vmatpush.bf16.msra.mxu0 0
  %1053 = vmatpush.bf16.msra.mxu0 0
  %1054 = vmatpush.bf16.msra.mxu0 0
  %1055 = vmatpush.bf16.msra.mxu0 0
  %1056 = vmatpush.bf16.msra.mxu0 %v1047
  %1057 = vmatmul.bf16.gmra.mxu0 %v1044
  %v1058 = vpop.f32.mrf.mxu0
  %v1059 = vadd.f32 0.0, %v1058
  %v1060 = vpop.f32.mrf.mxu0
  %1061 = vdwg.mxu0
  %v1063 = vsel %vm148, %v68, 0
  %v1066 = vsel %vm152, %v132, 0
  %1068 = vmatpush.bf16.msra.mxu0 0
  %1069 = vmatpush.bf16.msra.mxu0 0
  %1070 = vmatpush.bf16.msra.mxu0 0
  %1071 = vmatpush.bf16.msra.mxu0 0
  %1072 = vmatpush.bf16.msra.mxu0 0
  %1073 = vmatpush.bf16.msra.mxu0 0
  %1074 = vmatpush.bf16.msra.mxu0 0
  %1075 = vmatpush.bf16.msra.mxu0 %v1066
  %1076 = vmatmul.bf16.gmra.mxu0 %v1063
  %v1077 = vpop.f32.mrf.mxu0
  %v1078 = vadd.f32 0.0, %v1077
  %v1079 = vpop.f32.mrf.mxu0
  %1080 = vdwg.mxu0
  %v1082 = vsel %vm148, %v69, 0
  %v1085 = vsel %vm152, %v133, 0
  %1087 = vmatpush.bf16.msra.mxu0 0
  %1088 = vmatpush.bf16.msra.mxu0 0
  %1089 = vmatpush.bf16.msra.mxu0 0
  %1090 = vmatpush.bf16.msra.mxu0 0
  %1091 = vmatpush.bf16.msra.mxu0 0
  %1092 = vmatpush.bf16.msra.mxu0 0
  %1093 = vmatpush.bf16.msra.mxu0 0
  %1094 = vmatpush.bf16.msra.mxu0 %v1085
  %1095 = vmatmul.bf16.gmra.mxu0 %v1082
  %v1096 = vpop.f32.mrf.mxu0
  %v1097 = vadd.f32 0.0, %v1096
  %v1098 = vpop.f32.mrf.mxu0
  %1099 = vdwg.mxu0
  %v1101 = vsel %vm148, %v70, 0
  %v1104 = vsel %vm152, %v134, 0
  %1106 = vmatpush.bf16.msra.mxu0 0
  %1107 = vmatpush.bf16.msra.mxu0 0
  %1108 = vmatpush.bf16.msra.mxu0 0
  %1109 = vmatpush.bf16.msra.mxu0 0
  %1110 = vmatpush.bf16.msra.mxu0 0
  %1111 = vmatpush.bf16.msra.mxu0 0
  %1112 = vmatpush.bf16.msra.mxu0 0
  %1113 = vmatpush.bf16.msra.mxu0 %v1104
  %1114 = vmatmul.bf16.gmra.mxu0 %v1101
  %v1115 = vpop.f32.mrf.mxu0
  %v1116 = vadd.f32 0.0, %v1115
  %v1117 = vpop.f32.mrf.mxu0
  %1118 = vdwg.mxu0
  %v1120 = vsel %vm148, %v71, 0
  %v1123 = vsel %vm152, %v135, 0
  %1125 = vmatpush.bf16.msra.mxu0 0
  %1126 = vmatpush.bf16.msra.mxu0 0
  %1127 = vmatpush.bf16.msra.mxu0 0
  %1128 = vmatpush.bf16.msra.mxu0 0
  %1129 = vmatpush.bf16.msra.mxu0 0
  %1130 = vmatpush.bf16.msra.mxu0 0
  %1131 = vmatpush.bf16.msra.mxu0 0
  %1132 = vmatpush.bf16.msra.mxu0 %v1123
  %1133 = vmatmul.bf16.gmra.mxu0 %v1120
  %v1134 = vpop.f32.mrf.mxu0
  %v1135 = vadd.f32 0.0, %v1134
  %v1136 = vpop.f32.mrf.mxu0
  %1137 = vdwg.mxu0
  %v1139 = vsel %vm148, %v72, 0
  %v1142 = vsel %vm152, %v136, 0
  %1144 = vmatpush.bf16.msra.mxu0 0
  %1145 = vmatpush.bf16.msra.mxu0 0
  %1146 = vmatpush.bf16.msra.mxu0 0
  %1147 = vmatpush.bf16.msra.mxu0 0
  %1148 = vmatpush.bf16.msra.mxu0 0
  %1149 = vmatpush.bf16.msra.mxu0 0
  %1150 = vmatpush.bf16.msra.mxu0 0
  %1151 = vmatpush.bf16.msra.mxu0 %v1142
  %1152 = vmatmul.bf16.gmra.mxu0 %v1139
  %v1153 = vpop.f32.mrf.mxu0
  %v1154 = vadd.f32 0.0, %v1153
  %v1155 = vpop.f32.mrf.mxu0
  %1156 = vdwg.mxu0
  %v1158 = vsel %vm148, %v73, 0
  %v1161 = vsel %vm152, %v137, 0
  %1163 = vmatpush.bf16.msra.mxu0 0
  %1164 = vmatpush.bf16.msra.mxu0 0
  %1165 = vmatpush.bf16.msra.mxu0 0
  %1166 = vmatpush.bf16.msra.mxu0 0
  %1167 = vmatpush.bf16.msra.mxu0 0
  %1168 = vmatpush.bf16.msra.mxu0 0
  %1169 = vmatpush.bf16.msra.mxu0 0
  %1170 = vmatpush.bf16.msra.mxu0 %v1161
  %1171 = vmatmul.bf16.gmra.mxu0 %v1158
  %v1172 = vpop.f32.mrf.mxu0
  %v1173 = vadd.f32 0.0, %v1172
  %v1174 = vpop.f32.mrf.mxu0
  %1175 = vdwg.mxu0
  %v1177 = vsel %vm148, %v74, 0
  %v1180 = vsel %vm152, %v138, 0
  %1182 = vmatpush.bf16.msra.mxu0 0
  %1183 = vmatpush.bf16.msra.mxu0 0
  %1184 = vmatpush.bf16.msra.mxu0 0
  %1185 = vmatpush.bf16.msra.mxu0 0
  %1186 = vmatpush.bf16.msra.mxu0 0
  %1187 = vmatpush.bf16.msra.mxu0 0
  %1188 = vmatpush.bf16.msra.mxu0 0
  %1189 = vmatpush.bf16.msra.mxu0 %v1180
  %1190 = vmatmul.bf16.gmra.mxu0 %v1177
  %v1191 = vpop.f32.mrf.mxu0
  %v1192 = vadd.f32 0.0, %v1191
  %v1193 = vpop.f32.mrf.mxu0
  %1194 = vdwg.mxu0
  %v1196 = vsel %vm148, %v75, 0
  %v1199 = vsel %vm152, %v139, 0
  %1201 = vmatpush.bf16.msra.mxu0 0
  %1202 = vmatpush.bf16.msra.mxu0 0
  %1203 = vmatpush.bf16.msra.mxu0 0
  %1204 = vmatpush.bf16.msra.mxu0 0
  %1205 = vmatpush.bf16.msra.mxu0 0
  %1206 = vmatpush.bf16.msra.mxu0 0
  %1207 = vmatpush.bf16.msra.mxu0 0
  %1208 = vmatpush.bf16.msra.mxu0 %v1199
  %1209 = vmatmul.bf16.gmra.mxu0 %v1196
  %v1210 = vpop.f32.mrf.mxu0
  %v1211 = vadd.f32 0.0, %v1210
  %v1212 = vpop.f32.mrf.mxu0
  %1213 = vdwg.mxu0
  %v1215 = vsel %vm148, %v76, 0
  %v1218 = vsel %vm152, %v140, 0
  %1220 = vmatpush.bf16.msra.mxu0 0
  %1221 = vmatpush.bf16.msra.mxu0 0
  %1222 = vmatpush.bf16.msra.mxu0 0
  %1223 = vmatpush.bf16.msra.mxu0 0
  %1224 = vmatpush.bf16.msra.mxu0 0
  %1225 = vmatpush.bf16.msra.mxu0 0
  %1226 = vmatpush.bf16.msra.mxu0 0
  %1227 = vmatpush.bf16.msra.mxu0 %v1218
  %1228 = vmatmul.bf16.gmra.mxu0 %v1215
  %v1229 = vpop.f32.mrf.mxu0
  %v1230 = vadd.f32 0.0, %v1229
  %v1231 = vpop.f32.mrf.mxu0
  %1232 = vdwg.mxu0
  %v1234 = vsel %vm148, %v77, 0
  %v1237 = vsel %vm152, %v141, 0
  %1239 = vmatpush.bf16.msra.mxu0 0
  %1240 = vmatpush.bf16.msra.mxu0 0
  %1241 = vmatpush.bf16.msra.mxu0 0
  %1242 = vmatpush.bf16.msra.mxu0 0
  %1243 = vmatpush.bf16.msra.mxu0 0
  %1244 = vmatpush.bf16.msra.mxu0 0
  %1245 = vmatpush.bf16.msra.mxu0 0
  %1246 = vmatpush.bf16.msra.mxu0 %v1237
  %1247 = vmatmul.bf16.gmra.mxu0 %v1234
  %v1248 = vpop.f32.mrf.mxu0
  %v1249 = vadd.f32 0.0, %v1248
  %v1250 = vpop.f32.mrf.mxu0
  %1251 = vdwg.mxu0
  %v1253 = vsel %vm148, %v78, 0
  %v1256 = vsel %vm152, %v142, 0
  %1258 = vmatpush.bf16.msra.mxu0 0
  %1259 = vmatpush.bf16.msra.mxu0 0
  %1260 = vmatpush.bf16.msra.mxu0 0
  %1261 = vmatpush.bf16.msra.mxu0 0
  %1262 = vmatpush.bf16.msra.mxu0 0
  %1263 = vmatpush.bf16.msra.mxu0 0
  %1264 = vmatpush.bf16.msra.mxu0 0
  %1265 = vmatpush.bf16.msra.mxu0 %v1256
  %1266 = vmatmul.bf16.gmra.mxu0 %v1253
  %v1267 = vpop.f32.mrf.mxu0
  %v1268 = vadd.f32 0.0, %v1267
  %v1269 = vpop.f32.mrf.mxu0
  %1270 = vdwg.mxu0
  %v1272 = vsel %vm148, %v79, 0
  %v1275 = vsel %vm152, %v143, 0
  %1277 = vmatpush.bf16.msra.mxu0 0
  %1278 = vmatpush.bf16.msra.mxu0 0
  %1279 = vmatpush.bf16.msra.mxu0 0
  %1280 = vmatpush.bf16.msra.mxu0 0
  %1281 = vmatpush.bf16.msra.mxu0 0
  %1282 = vmatpush.bf16.msra.mxu0 0
  %1283 = vmatpush.bf16.msra.mxu0 0
  %1284 = vmatpush.bf16.msra.mxu0 %v1275
  %1285 = vmatmul.bf16.gmra.mxu0 %v1272
  %v1286 = vpop.f32.mrf.mxu0
  %v1287 = vadd.f32 0.0, %v1286
  %v1288 = vpop.f32.mrf.mxu0
  %1289 = vdwg.mxu0
  %v1291 = vsel %vm148, %v80, 0
  %v1294 = vsel %vm152, %v144, 0
  %1296 = vmatpush.bf16.msra.mxu0 0
  %1297 = vmatpush.bf16.msra.mxu0 0
  %1298 = vmatpush.bf16.msra.mxu0 0
  %1299 = vmatpush.bf16.msra.mxu0 0
  %1300 = vmatpush.bf16.msra.mxu0 0
  %1301 = vmatpush.bf16.msra.mxu0 0
  %1302 = vmatpush.bf16.msra.mxu0 0
  %1303 = vmatpush.bf16.msra.mxu0 %v1294
  %1304 = vmatmul.bf16.gmra.mxu0 %v1291
  %v1305 = vpop.f32.mrf.mxu0
  %v1306 = vadd.f32 0.0, %v1305
  %v1307 = vpop.f32.mrf.mxu0
  %1308 = vdwg.mxu0
  %v1310 = vsel %vm148, %v81, 0
  %v1313 = vsel %vm152, %v145, 0
  %1315 = vmatpush.bf16.msra.mxu0 0
  %1316 = vmatpush.bf16.msra.mxu0 0
  %1317 = vmatpush.bf16.msra.mxu0 0
  %1318 = vmatpush.bf16.msra.mxu0 0
  %1319 = vmatpush.bf16.msra.mxu0 0
  %1320 = vmatpush.bf16.msra.mxu0 0
  %1321 = vmatpush.bf16.msra.mxu0 0
  %1322 = vmatpush.bf16.msra.mxu0 %v1313
  %1323 = vmatmul.bf16.gmra.mxu0 %v1310
  %v1324 = vpop.f32.mrf.mxu0
  %v1325 = vadd.f32 0.0, %v1324
  %v1326 = vpop.f32.mrf.mxu0
  %1327 = vdwg.mxu0
  %v1329 = vsel %vm148, %v82, 0
  %v1332 = vsel %vm152, %v146, 0
  %1334 = vmatpush.bf16.msra.mxu0 0
  %1335 = vmatpush.bf16.msra.mxu0 0
  %1336 = vmatpush.bf16.msra.mxu0 0
  %1337 = vmatpush.bf16.msra.mxu0 0
  %1338 = vmatpush.bf16.msra.mxu0 0
  %1339 = vmatpush.bf16.msra.mxu0 0
  %1340 = vmatpush.bf16.msra.mxu0 0
  %1341 = vmatpush.bf16.msra.mxu0 %v1332
  %1342 = vmatmul.bf16.gmra.mxu0 %v1329
  %v1343 = vpop.f32.mrf.mxu0
  %v1344 = vadd.f32 0.0, %v1343
  %v1345 = vpop.f32.mrf.mxu0
  %1346 = vdwg.mxu0
  %v1348 = vsel %vm148, %v83, 0
  %v1351 = vsel %vm152, %v147, 0
  %1353 = vmatpush.bf16.msra.mxu0 0
  %1354 = vmatpush.bf16.msra.mxu0 0
  %1355 = vmatpush.bf16.msra.mxu0 0
  %1356 = vmatpush.bf16.msra.mxu0 0
  %1357 = vmatpush.bf16.msra.mxu0 0
  %1358 = vmatpush.bf16.msra.mxu0 0
  %1359 = vmatpush.bf16.msra.mxu0 0
  %1360 = vmatpush.bf16.msra.mxu0 %v1351
  %1361 = vmatmul.bf16.gmra.mxu0 %v1348
  %v1362 = vpop.f32.mrf.mxu0
  %v1363 = vadd.f32 0.0, %v1362
  %v1364 = vpop.f32.mrf.mxu0
  %1365 = vdwg.mxu0
  %1366 = vmatpush.bf16.msra.mxu0 0
  %1367 = vmatpush.bf16.msra.mxu0 0
  %1368 = vmatpush.bf16.msra.mxu0 0
  %1369 = vmatpush.bf16.msra.mxu0 0
  %1370 = vmatpush.bf16.msra.mxu0 0
  %1371 = vmatpush.bf16.msra.mxu0 0
  %1372 = vmatpush.bf16.msra.mxu0 0
  %1373 = vmatpush.bf16.msra.mxu0 %v154
  %1374 = vmatmul.bf16.gmra.mxu0 %v759
  %v1375 = vpop.f32.mrf.mxu0
  %v1376 = vadd.f32 0.0, %v1375
  %v1377 = vpop.f32.mrf.mxu0
  %1378 = vdwg.mxu0
  %1379 = vmatpush.bf16.msra.mxu0 0
  %1380 = vmatpush.bf16.msra.mxu0 0
  %1381 = vmatpush.bf16.msra.mxu0 0
  %1382 = vmatpush.bf16.msra.mxu0 0
  %1383 = vmatpush.bf16.msra.mxu0 0
  %1384 = vmatpush.bf16.msra.mxu0 0
  %1385 = vmatpush.bf16.msra.mxu0 0
  %1386 = vmatpush.bf16.msra.mxu0 %v173
  %1387 = vmatmul.bf16.gmra.mxu0 %v778
  %v1388 = vpop.f32.mrf.mxu0
  %v1389 = vadd.f32 0.0, %v1388
  %v1390 = vpop.f32.mrf.mxu0
  %1391 = vdwg.mxu0
  %1392 = vmatpush.bf16.msra.mxu0 0
  %1393 = vmatpush.bf16.msra.mxu0 0
  %1394 = vmatpush.bf16.msra.mxu0 0
  %1395 = vmatpush.bf16.msra.mxu0 0
  %1396 = vmatpush.bf16.msra.mxu0 0
  %1397 = vmatpush.bf16.msra.mxu0 0
  %1398 = vmatpush.bf16.msra.mxu0 0
  %1399 = vmatpush.bf16.msra.mxu0 %v192
  %1400 = vmatmul.bf16.gmra.mxu0 %v797
  %v1401 = vpop.f32.mrf.mxu0
  %v1402 = vadd.f32 0.0, %v1401
  %v1403 = vpop.f32.mrf.mxu0
  %1404 = vdwg.mxu0
  %1405 = vmatpush.bf16.msra.mxu0 0
  %1406 = vmatpush.bf16.msra.mxu0 0
  %1407 = vmatpush.bf16.msra.mxu0 0
  %1408 = vmatpush.bf16.msra.mxu0 0
  %1409 = vmatpush.bf16.msra.mxu0 0
  %1410 = vmatpush.bf16.msra.mxu0 0
  %1411 = vmatpush.bf16.msra.mxu0 0
  %1412 = vmatpush.bf16.msra.mxu0 %v211
  %1413 = vmatmul.bf16.gmra.mxu0 %v816
  %v1414 = vpop.f32.mrf.mxu0
  %v1415 = vadd.f32 0.0, %v1414
  %v1416 = vpop.f32.mrf.mxu0
  %1417 = vdwg.mxu0
  %1418 = vmatpush.bf16.msra.mxu0 0
  %1419 = vmatpush.bf16.msra.mxu0 0
  %1420 = vmatpush.bf16.msra.mxu0 0
  %1421 = vmatpush.bf16.msra.mxu0 0
  %1422 = vmatpush.bf16.msra.mxu0 0
  %1423 = vmatpush.bf16.msra.mxu0 0
  %1424 = vmatpush.bf16.msra.mxu0 0
  %1425 = vmatpush.bf16.msra.mxu0 %v230
  %1426 = vmatmul.bf16.gmra.mxu0 %v835
  %v1427 = vpop.f32.mrf.mxu0
  %v1428 = vadd.f32 0.0, %v1427
  %v1429 = vpop.f32.mrf.mxu0
  %1430 = vdwg.mxu0
  %1431 = vmatpush.bf16.msra.mxu0 0
  %1432 = vmatpush.bf16.msra.mxu0 0
  %1433 = vmatpush.bf16.msra.mxu0 0
  %1434 = vmatpush.bf16.msra.mxu0 0
  %1435 = vmatpush.bf16.msra.mxu0 0
  %1436 = vmatpush.bf16.msra.mxu0 0
  %1437 = vmatpush.bf16.msra.mxu0 0
  %1438 = vmatpush.bf16.msra.mxu0 %v249
  %1439 = vmatmul.bf16.gmra.mxu0 %v854
  %v1440 = vpop.f32.mrf.mxu0
  %v1441 = vadd.f32 0.0, %v1440
  %v1442 = vpop.f32.mrf.mxu0
  %1443 = vdwg.mxu0
  %1444 = vmatpush.bf16.msra.mxu0 0
  %1445 = vmatpush.bf16.msra.mxu0 0
  %1446 = vmatpush.bf16.msra.mxu0 0
  %1447 = vmatpush.bf16.msra.mxu0 0
  %1448 = vmatpush.bf16.msra.mxu0 0
  %1449 = vmatpush.bf16.msra.mxu0 0
  %1450 = vmatpush.bf16.msra.mxu0 0
  %1451 = vmatpush.bf16.msra.mxu0 %v268
  %1452 = vmatmul.bf16.gmra.mxu0 %v873
  %v1453 = vpop.f32.mrf.mxu0
  %v1454 = vadd.f32 0.0, %v1453
  %v1455 = vpop.f32.mrf.mxu0
  %1456 = vdwg.mxu0
  %1457 = vmatpush.bf16.msra.mxu0 0
  %1458 = vmatpush.bf16.msra.mxu0 0
  %1459 = vmatpush.bf16.msra.mxu0 0
  %1460 = vmatpush.bf16.msra.mxu0 0
  %1461 = vmatpush.bf16.msra.mxu0 0
  %1462 = vmatpush.bf16.msra.mxu0 0
  %1463 = vmatpush.bf16.msra.mxu0 0
  %1464 = vmatpush.bf16.msra.mxu0 %v287
  %1465 = vmatmul.bf16.gmra.mxu0 %v892
  %v1466 = vpop.f32.mrf.mxu0
  %v1467 = vadd.f32 0.0, %v1466
  %v1468 = vpop.f32.mrf.mxu0
  %1469 = vdwg.mxu0
  %1470 = vmatpush.bf16.msra.mxu0 0
  %1471 = vmatpush.bf16.msra.mxu0 0
  %1472 = vmatpush.bf16.msra.mxu0 0
  %1473 = vmatpush.bf16.msra.mxu0 0
  %1474 = vmatpush.bf16.msra.mxu0 0
  %1475 = vmatpush.bf16.msra.mxu0 0
  %1476 = vmatpush.bf16.msra.mxu0 0
  %1477 = vmatpush.bf16.msra.mxu0 %v306
  %1478 = vmatmul.bf16.gmra.mxu0 %v911
  %v1479 = vpop.f32.mrf.mxu0
  %v1480 = vadd.f32 0.0, %v1479
  %v1481 = vpop.f32.mrf.mxu0
  %1482 = vdwg.mxu0
  %1483 = vmatpush.bf16.msra.mxu0 0
  %1484 = vmatpush.bf16.msra.mxu0 0
  %1485 = vmatpush.bf16.msra.mxu0 0
  %1486 = vmatpush.bf16.msra.mxu0 0
  %1487 = vmatpush.bf16.msra.mxu0 0
  %1488 = vmatpush.bf16.msra.mxu0 0
  %1489 = vmatpush.bf16.msra.mxu0 0
  %1490 = vmatpush.bf16.msra.mxu0 %v325
  %1491 = vmatmul.bf16.gmra.mxu0 %v930
  %v1492 = vpop.f32.mrf.mxu0
  %v1493 = vadd.f32 0.0, %v1492
  %v1494 = vpop.f32.mrf.mxu0
  %1495 = vdwg.mxu0
  %1496 = vmatpush.bf16.msra.mxu0 0
  %1497 = vmatpush.bf16.msra.mxu0 0
  %1498 = vmatpush.bf16.msra.mxu0 0
  %1499 = vmatpush.bf16.msra.mxu0 0
  %1500 = vmatpush.bf16.msra.mxu0 0
  %1501 = vmatpush.bf16.msra.mxu0 0
  %1502 = vmatpush.bf16.msra.mxu0 0
  %1503 = vmatpush.bf16.msra.mxu0 %v344
  %1504 = vmatmul.bf16.gmra.mxu0 %v949
  %v1505 = vpop.f32.mrf.mxu0
  %v1506 = vadd.f32 0.0, %v1505
  %v1507 = vpop.f32.mrf.mxu0
  %1508 = vdwg.mxu0
  %1509 = vmatpush.bf16.msra.mxu0 0
  %1510 = vmatpush.bf16.msra.mxu0 0
  %1511 = vmatpush.bf16.msra.mxu0 0
  %1512 = vmatpush.bf16.msra.mxu0 0
  %1513 = vmatpush.bf16.msra.mxu0 0
  %1514 = vmatpush.bf16.msra.mxu0 0
  %1515 = vmatpush.bf16.msra.mxu0 0
  %1516 = vmatpush.bf16.msra.mxu0 %v363
  %1517 = vmatmul.bf16.gmra.mxu0 %v968
  %v1518 = vpop.f32.mrf.mxu0
  %v1519 = vadd.f32 0.0, %v1518
  %v1520 = vpop.f32.mrf.mxu0
  %1521 = vdwg.mxu0
  %1522 = vmatpush.bf16.msra.mxu0 0
  %1523 = vmatpush.bf16.msra.mxu0 0
  %1524 = vmatpush.bf16.msra.mxu0 0
  %1525 = vmatpush.bf16.msra.mxu0 0
  %1526 = vmatpush.bf16.msra.mxu0 0
  %1527 = vmatpush.bf16.msra.mxu0 0
  %1528 = vmatpush.bf16.msra.mxu0 0
  %1529 = vmatpush.bf16.msra.mxu0 %v382
  %1530 = vmatmul.bf16.gmra.mxu0 %v987
  %v1531 = vpop.f32.mrf.mxu0
  %v1532 = vadd.f32 0.0, %v1531
  %v1533 = vpop.f32.mrf.mxu0
  %1534 = vdwg.mxu0
  %1535 = vmatpush.bf16.msra.mxu0 0
  %1536 = vmatpush.bf16.msra.mxu0 0
  %1537 = vmatpush.bf16.msra.mxu0 0
  %1538 = vmatpush.bf16.msra.mxu0 0
  %1539 = vmatpush.bf16.msra.mxu0 0
  %1540 = vmatpush.bf16.msra.mxu0 0
  %1541 = vmatpush.bf16.msra.mxu0 0
  %1542 = vmatpush.bf16.msra.mxu0 %v401
  %1543 = vmatmul.bf16.gmra.mxu0 %v1006
  %v1544 = vpop.f32.mrf.mxu0
  %v1545 = vadd.f32 0.0, %v1544
  %v1546 = vpop.f32.mrf.mxu0
  %1547 = vdwg.mxu0
  %1548 = vmatpush.bf16.msra.mxu0 0
  %1549 = vmatpush.bf16.msra.mxu0 0
  %1550 = vmatpush.bf16.msra.mxu0 0
  %1551 = vmatpush.bf16.msra.mxu0 0
  %1552 = vmatpush.bf16.msra.mxu0 0
  %1553 = vmatpush.bf16.msra.mxu0 0
  %1554 = vmatpush.bf16.msra.mxu0 0
  %1555 = vmatpush.bf16.msra.mxu0 %v420
  %1556 = vmatmul.bf16.gmra.mxu0 %v1025
  %v1557 = vpop.f32.mrf.mxu0
  %v1558 = vadd.f32 0.0, %v1557
  %v1559 = vpop.f32.mrf.mxu0
  %1560 = vdwg.mxu0
  %1561 = vmatpush.bf16.msra.mxu0 0
  %1562 = vmatpush.bf16.msra.mxu0 0
  %1563 = vmatpush.bf16.msra.mxu0 0
  %1564 = vmatpush.bf16.msra.mxu0 0
  %1565 = vmatpush.bf16.msra.mxu0 0
  %1566 = vmatpush.bf16.msra.mxu0 0
  %1567 = vmatpush.bf16.msra.mxu0 0
  %1568 = vmatpush.bf16.msra.mxu0 %v439
  %1569 = vmatmul.bf16.gmra.mxu0 %v1044
  %v1570 = vpop.f32.mrf.mxu0
  %v1571 = vadd.f32 0.0, %v1570
  %v1572 = vpop.f32.mrf.mxu0
  %1573 = vdwg.mxu0
  %1574 = vmatpush.bf16.msra.mxu0 0
  %1575 = vmatpush.bf16.msra.mxu0 0
  %1576 = vmatpush.bf16.msra.mxu0 0
  %1577 = vmatpush.bf16.msra.mxu0 0
  %1578 = vmatpush.bf16.msra.mxu0 0
  %1579 = vmatpush.bf16.msra.mxu0 0
  %1580 = vmatpush.bf16.msra.mxu0 0
  %1581 = vmatpush.bf16.msra.mxu0 %v458
  %1582 = vmatmul.bf16.gmra.mxu0 %v1063
  %v1583 = vpop.f32.mrf.mxu0
  %v1584 = vadd.f32 0.0, %v1583
  %v1585 = vpop.f32.mrf.mxu0
  %1586 = vdwg.mxu0
  %1587 = vmatpush.bf16.msra.mxu0 0
  %1588 = vmatpush.bf16.msra.mxu0 0
  %1589 = vmatpush.bf16.msra.mxu0 0
  %1590 = vmatpush.bf16.msra.mxu0 0
  %1591 = vmatpush.bf16.msra.mxu0 0
  %1592 = vmatpush.bf16.msra.mxu0 0
  %1593 = vmatpush.bf16.msra.mxu0 0
  %1594 = vmatpush.bf16.msra.mxu0 %v477
  %1595 = vmatmul.bf16.gmra.mxu0 %v1082
  %v1596 = vpop.f32.mrf.mxu0
  %v1597 = vadd.f32 0.0, %v1596
  %v1598 = vpop.f32.mrf.mxu0
  %1599 = vdwg.mxu0
  %1600 = vmatpush.bf16.msra.mxu0 0
  %1601 = vmatpush.bf16.msra.mxu0 0
  %1602 = vmatpush.bf16.msra.mxu0 0
  %1603 = vmatpush.bf16.msra.mxu0 0
  %1604 = vmatpush.bf16.msra.mxu0 0
  %1605 = vmatpush.bf16.msra.mxu0 0
  %1606 = vmatpush.bf16.msra.mxu0 0
  %1607 = vmatpush.bf16.msra.mxu0 %v496
  %1608 = vmatmul.bf16.gmra.mxu0 %v1101
  %v1609 = vpop.f32.mrf.mxu0
  %v1610 = vadd.f32 0.0, %v1609
  %v1611 = vpop.f32.mrf.mxu0
  %1612 = vdwg.mxu0
  %1613 = vmatpush.bf16.msra.mxu0 0
  %1614 = vmatpush.bf16.msra.mxu0 0
  %1615 = vmatpush.bf16.msra.mxu0 0
  %1616 = vmatpush.bf16.msra.mxu0 0
  %1617 = vmatpush.bf16.msra.mxu0 0
  %1618 = vmatpush.bf16.msra.mxu0 0
  %1619 = vmatpush.bf16.msra.mxu0 0
  %1620 = vmatpush.bf16.msra.mxu0 %v515
  %1621 = vmatmul.bf16.gmra.mxu0 %v1120
  %v1622 = vpop.f32.mrf.mxu0
  %v1623 = vadd.f32 0.0, %v1622
  %v1624 = vpop.f32.mrf.mxu0
  %1625 = vdwg.mxu0
  %1626 = vmatpush.bf16.msra.mxu0 0
  %1627 = vmatpush.bf16.msra.mxu0 0
  %1628 = vmatpush.bf16.msra.mxu0 0
  %1629 = vmatpush.bf16.msra.mxu0 0
  %1630 = vmatpush.bf16.msra.mxu0 0
  %1631 = vmatpush.bf16.msra.mxu0 0
  %1632 = vmatpush.bf16.msra.mxu0 0
  %1633 = vmatpush.bf16.msra.mxu0 %v534
  %1634 = vmatmul.bf16.gmra.mxu0 %v1139
  %v1635 = vpop.f32.mrf.mxu0
  %v1636 = vadd.f32 0.0, %v1635
  %v1637 = vpop.f32.mrf.mxu0
  %1638 = vdwg.mxu0
  %1639 = vmatpush.bf16.msra.mxu0 0
  %1640 = vmatpush.bf16.msra.mxu0 0
  %1641 = vmatpush.bf16.msra.mxu0 0
  %1642 = vmatpush.bf16.msra.mxu0 0
  %1643 = vmatpush.bf16.msra.mxu0 0
  %1644 = vmatpush.bf16.msra.mxu0 0
  %1645 = vmatpush.bf16.msra.mxu0 0
  %1646 = vmatpush.bf16.msra.mxu0 %v553
  %1647 = vmatmul.bf16.gmra.mxu0 %v1158
  %v1648 = vpop.f32.mrf.mxu0
  %v1649 = vadd.f32 0.0, %v1648
  %v1650 = vpop.f32.mrf.mxu0
  %1651 = vdwg.mxu0
  %1652 = vmatpush.bf16.msra.mxu0 0
  %1653 = vmatpush.bf16.msra.mxu0 0
  %1654 = vmatpush.bf16.msra.mxu0 0
  %1655 = vmatpush.bf16.msra.mxu0 0
  %1656 = vmatpush.bf16.msra.mxu0 0
  %1657 = vmatpush.bf16.msra.mxu0 0
  %1658 = vmatpush.bf16.msra.mxu0 0
  %1659 = vmatpush.bf16.msra.mxu0 %v572
  %1660 = vmatmul.bf16.gmra.mxu0 %v1177
  %v1661 = vpop.f32.mrf.mxu0
  %v1662 = vadd.f32 0.0, %v1661
  %v1663 = vpop.f32.mrf.mxu0
  %1664 = vdwg.mxu0
  %1665 = vmatpush.bf16.msra.mxu0 0
  %1666 = vmatpush.bf16.msra.mxu0 0
  %1667 = vmatpush.bf16.msra.mxu0 0
  %1668 = vmatpush.bf16.msra.mxu0 0
  %1669 = vmatpush.bf16.msra.mxu0 0
  %1670 = vmatpush.bf16.msra.mxu0 0
  %1671 = vmatpush.bf16.msra.mxu0 0
  %1672 = vmatpush.bf16.msra.mxu0 %v591
  %1673 = vmatmul.bf16.gmra.mxu0 %v1196
  %v1674 = vpop.f32.mrf.mxu0
  %v1675 = vadd.f32 0.0, %v1674
  %v1676 = vpop.f32.mrf.mxu0
  %1677 = vdwg.mxu0
  %1678 = vmatpush.bf16.msra.mxu0 0
  %1679 = vmatpush.bf16.msra.mxu0 0
  %1680 = vmatpush.bf16.msra.mxu0 0
  %1681 = vmatpush.bf16.msra.mxu0 0
  %1682 = vmatpush.bf16.msra.mxu0 0
  %1683 = vmatpush.bf16.msra.mxu0 0
  %1684 = vmatpush.bf16.msra.mxu0 0
  %1685 = vmatpush.bf16.msra.mxu0 %v610
  %1686 = vmatmul.bf16.gmra.mxu0 %v1215
  %v1687 = vpop.f32.mrf.mxu0
  %v1688 = vadd.f32 0.0, %v1687
  %v1689 = vpop.f32.mrf.mxu0
  %1690 = vdwg.mxu0
  %1691 = vmatpush.bf16.msra.mxu0 0
  %1692 = vmatpush.bf16.msra.mxu0 0
  %1693 = vmatpush.bf16.msra.mxu0 0
  %1694 = vmatpush.bf16.msra.mxu0 0
  %1695 = vmatpush.bf16.msra.mxu0 0
  %1696 = vmatpush.bf16.msra.mxu0 0
  %1697 = vmatpush.bf16.msra.mxu0 0
  %1698 = vmatpush.bf16.msra.mxu0 %v629
  %1699 = vmatmul.bf16.gmra.mxu0 %v1234
  %v1700 = vpop.f32.mrf.mxu0
  %v1701 = vadd.f32 0.0, %v1700
  %v1702 = vpop.f32.mrf.mxu0
  %1703 = vdwg.mxu0
  %1704 = vmatpush.bf16.msra.mxu0 0
  %1705 = vmatpush.bf16.msra.mxu0 0
  %1706 = vmatpush.bf16.msra.mxu0 0
  %1707 = vmatpush.bf16.msra.mxu0 0
  %1708 = vmatpush.bf16.msra.mxu0 0
  %1709 = vmatpush.bf16.msra.mxu0 0
  %1710 = vmatpush.bf16.msra.mxu0 0
  %1711 = vmatpush.bf16.msra.mxu0 %v648
  %1712 = vmatmul.bf16.gmra.mxu0 %v1253
  %v1713 = vpop.f32.mrf.mxu0
  %v1714 = vadd.f32 0.0, %v1713
  %v1715 = vpop.f32.mrf.mxu0
  %1716 = vdwg.mxu0
  %1717 = vmatpush.bf16.msra.mxu0 0
  %1718 = vmatpush.bf16.msra.mxu0 0
  %1719 = vmatpush.bf16.msra.mxu0 0
  %1720 = vmatpush.bf16.msra.mxu0 0
  %1721 = vmatpush.bf16.msra.mxu0 0
  %1722 = vmatpush.bf16.msra.mxu0 0
  %1723 = vmatpush.bf16.msra.mxu0 0
  %1724 = vmatpush.bf16.msra.mxu0 %v667
  %1725 = vmatmul.bf16.gmra.mxu0 %v1272
  %v1726 = vpop.f32.mrf.mxu0
  %v1727 = vadd.f32 0.0, %v1726
  %v1728 = vpop.f32.mrf.mxu0
  %1729 = vdwg.mxu0
  %1730 = vmatpush.bf16.msra.mxu0 0
  %1731 = vmatpush.bf16.msra.mxu0 0
  %1732 = vmatpush.bf16.msra.mxu0 0
  %1733 = vmatpush.bf16.msra.mxu0 0
  %1734 = vmatpush.bf16.msra.mxu0 0
  %1735 = vmatpush.bf16.msra.mxu0 0
  %1736 = vmatpush.bf16.msra.mxu0 0
  %1737 = vmatpush.bf16.msra.mxu0 %v686
  %1738 = vmatmul.bf16.gmra.mxu0 %v1291
  %v1739 = vpop.f32.mrf.mxu0
  %v1740 = vadd.f32 0.0, %v1739
  %v1741 = vpop.f32.mrf.mxu0
  %1742 = vdwg.mxu0
  %1743 = vmatpush.bf16.msra.mxu0 0
  %1744 = vmatpush.bf16.msra.mxu0 0
  %1745 = vmatpush.bf16.msra.mxu0 0
  %1746 = vmatpush.bf16.msra.mxu0 0
  %1747 = vmatpush.bf16.msra.mxu0 0
  %1748 = vmatpush.bf16.msra.mxu0 0
  %1749 = vmatpush.bf16.msra.mxu0 0
  %1750 = vmatpush.bf16.msra.mxu0 %v705
  %1751 = vmatmul.bf16.gmra.mxu0 %v1310
  %v1752 = vpop.f32.mrf.mxu0
  %v1753 = vadd.f32 0.0, %v1752
  %v1754 = vpop.f32.mrf.mxu0
  %1755 = vdwg.mxu0
  %1756 = vmatpush.bf16.msra.mxu0 0
  %1757 = vmatpush.bf16.msra.mxu0 0
  %1758 = vmatpush.bf16.msra.mxu0 0
  %1759 = vmatpush.bf16.msra.mxu0 0
  %1760 = vmatpush.bf16.msra.mxu0 0
  %1761 = vmatpush.bf16.msra.mxu0 0
  %1762 = vmatpush.bf16.msra.mxu0 0
  %1763 = vmatpush.bf16.msra.mxu0 %v724
  %1764 = vmatmul.bf16.gmra.mxu0 %v1329
  %v1765 = vpop.f32.mrf.mxu0
  %v1766 = vadd.f32 0.0, %v1765
  %v1767 = vpop.f32.mrf.mxu0
  %1768 = vdwg.mxu0
  %1769 = vmatpush.bf16.msra.mxu0 0
  %1770 = vmatpush.bf16.msra.mxu0 0
  %1771 = vmatpush.bf16.msra.mxu0 0
  %1772 = vmatpush.bf16.msra.mxu0 0
  %1773 = vmatpush.bf16.msra.mxu0 0
  %1774 = vmatpush.bf16.msra.mxu0 0
  %1775 = vmatpush.bf16.msra.mxu0 0
  %1776 = vmatpush.bf16.msra.mxu0 %v743
  %1777 = vmatmul.bf16.gmra.mxu0 %v1348
  %v1778 = vpop.f32.mrf.mxu0
  %v1779 = vadd.f32 0.0, %v1778
  %v1780 = vpop.f32.mrf.mxu0
  %1781 = vdwg.mxu0
  %v1782 = vsub.f32 %v166, %v774
  %v1783 = vsub.f32 %v185, %v793
  %v1784 = vsub.f32 %v204, %v812
  %v1785 = vsub.f32 %v223, %v831
  %v1786 = vsub.f32 %v242, %v850
  %v1787 = vsub.f32 %v261, %v869
  %v1788 = vsub.f32 %v280, %v888
  %v1789 = vsub.f32 %v299, %v907
  %v1790 = vsub.f32 %v318, %v926
  %v1791 = vsub.f32 %v337, %v945
  %v1792 = vsub.f32 %v356, %v964
  %v1793 = vsub.f32 %v375, %v983
  %v1794 = vsub.f32 %v394, %v1002
  %v1795 = vsub.f32 %v413, %v1021
  %v1796 = vsub.f32 %v432, %v1040
  %v1797 = vsub.f32 %v451, %v1059
  %v1798 = vsub.f32 %v470, %v1078
  %v1799 = vsub.f32 %v489, %v1097
  %v1800 = vsub.f32 %v508, %v1116
  %v1801 = vsub.f32 %v527, %v1135
  %v1802 = vsub.f32 %v546, %v1154
  %v1803 = vsub.f32 %v565, %v1173
  %v1804 = vsub.f32 %v584, %v1192
  %v1805 = vsub.f32 %v603, %v1211
  %v1806 = vsub.f32 %v622, %v1230
  %v1807 = vsub.f32 %v641, %v1249
  %v1808 = vsub.f32 %v660, %v1268
  %v1809 = vsub.f32 %v679, %v1287
  %v1810 = vsub.f32 %v698, %v1306
  %v1811 = vsub.f32 %v717, %v1325
  %v1812 = vsub.f32 %v736, %v1344
  %v1813 = vsub.f32 %v755, %v1363
  %1814 = vst.msk [vmem:[%s4] sm:$0xff] %vm148, %v1782
  %1815 = vst.msk [vmem:[%s4 + $0x8] sm:$0xff] %vm148, %v1783
  %1816 = vst.msk [vmem:[%s4 + $0x10] sm:$0xff] %vm148, %v1784
  %1817 = vst.msk [vmem:[%s4 + $0x18] sm:$0xff] %vm148, %v1785
  %1818 = vst.msk [vmem:[%s4 + $0x20] sm:$0xff] %vm148, %v1786
  %1819 = vst.msk [vmem:[%s4 + $0x28] sm:$0xff] %vm148, %v1787
  %1820 = vst.msk [vmem:[%s4 + $0x30] sm:$0xff] %vm148, %v1788
  %1821 = vst.msk [vmem:[%s4 + $0x38] sm:$0xff] %vm148, %v1789
  %1822 = vst.msk [vmem:[%s4 + $0x40] sm:$0xff] %vm148, %v1790
  %1823 = vst.msk [vmem:[%s4 + $0x48] sm:$0xff] %vm148, %v1791
  %1824 = vst.msk [vmem:[%s4 + $0x50] sm:$0xff] %vm148, %v1792
  %1825 = vst.msk [vmem:[%s4 + $0x58] sm:$0xff] %vm148, %v1793
  %1826 = vst.msk [vmem:[%s4 + $0x60] sm:$0xff] %vm148, %v1794
  %1827 = vst.msk [vmem:[%s4 + $0x68] sm:$0xff] %vm148, %v1795
  %1828 = vst.msk [vmem:[%s4 + $0x70] sm:$0xff] %vm148, %v1796
  %1829 = vst.msk [vmem:[%s4 + $0x78] sm:$0xff] %vm148, %v1797
  %1830 = vst.msk [vmem:[%s4 + $0x80] sm:$0xff] %vm148, %v1798
  %1831 = vst.msk [vmem:[%s4 + $0x88] sm:$0xff] %vm148, %v1799
  %1832 = vst.msk [vmem:[%s4 + $0x90] sm:$0xff] %vm148, %v1800
  %1833 = vst.msk [vmem:[%s4 + $0x98] sm:$0xff] %vm148, %v1801
  %1834 = vst.msk [vmem:[%s4 + $0xa0] sm:$0xff] %vm148, %v1802
  %1835 = vst.msk [vmem:[%s4 + $0xa8] sm:$0xff] %vm148, %v1803
  %1836 = vst.msk [vmem:[%s4 + $0xb0] sm:$0xff] %vm148, %v1804
  %1837 = vst.msk [vmem:[%s4 + $0xb8] sm:$0xff] %vm148, %v1805
  %1838 = vst.msk [vmem:[%s4 + $0xc0] sm:$0xff] %vm148, %v1806
  %1839 = vst.msk [vmem:[%s4 + $0xc8] sm:$0xff] %vm148, %v1807
  %1840 = vst.msk [vmem:[%s4 + $0xd0] sm:$0xff] %vm148, %v1808
  %1841 = vst.msk [vmem:[%s4 + $0xd8] sm:$0xff] %vm148, %v1809
  %1842 = vst.msk [vmem:[%s4 + $0xe0] sm:$0xff] %vm148, %v1810
  %1843 = vst.msk [vmem:[%s4 + $0xe8] sm:$0xff] %vm148, %v1811
  %1844 = vst.msk [vmem:[%s4 + $0xf0] sm:$0xff] %vm148, %v1812
  %1845 = vst.msk [vmem:[%s4 + $0xf8] sm:$0xff] %vm148, %v1813
  %1846 = vmatpush.bf16.msra.mxu0 0
  %1847 = vmatpush.bf16.msra.mxu0 0
  %1848 = vmatpush.bf16.msra.mxu0 0
  %1849 = vmatpush.bf16.msra.mxu0 0
  %1850 = vmatpush.bf16.msra.mxu0 0
  %1851 = vmatpush.bf16.msra.mxu0 0
  %1852 = vmatpush.bf16.msra.mxu0 0
  %1853 = vmatpush.bf16.msra.mxu0 %v762
  %1854 = vmatmul.bf16.gmra.mxu0 %v150
  %v1855 = vpop.f32.mrf.mxu0
  %v1856 = vadd.f32 %v1376, %v1855
  %v1857 = vpop.f32.mrf.mxu0
  %1858 = vdwg.mxu0
  %1859 = vmatpush.bf16.msra.mxu0 0
  %1860 = vmatpush.bf16.msra.mxu0 0
  %1861 = vmatpush.bf16.msra.mxu0 0
  %1862 = vmatpush.bf16.msra.mxu0 0
  %1863 = vmatpush.bf16.msra.mxu0 0
  %1864 = vmatpush.bf16.msra.mxu0 0
  %1865 = vmatpush.bf16.msra.mxu0 0
  %1866 = vmatpush.bf16.msra.mxu0 %v781
  %1867 = vmatmul.bf16.gmra.mxu0 %v170
  %v1868 = vpop.f32.mrf.mxu0
  %v1869 = vadd.f32 %v1389, %v1868
  %v1870 = vpop.f32.mrf.mxu0
  %1871 = vdwg.mxu0
  %1872 = vmatpush.bf16.msra.mxu0 0
  %1873 = vmatpush.bf16.msra.mxu0 0
  %1874 = vmatpush.bf16.msra.mxu0 0
  %1875 = vmatpush.bf16.msra.mxu0 0
  %1876 = vmatpush.bf16.msra.mxu0 0
  %1877 = vmatpush.bf16.msra.mxu0 0
  %1878 = vmatpush.bf16.msra.mxu0 0
  %1879 = vmatpush.bf16.msra.mxu0 %v800
  %1880 = vmatmul.bf16.gmra.mxu0 %v189
  %v1881 = vpop.f32.mrf.mxu0
  %v1882 = vadd.f32 %v1402, %v1881
  %v1883 = vpop.f32.mrf.mxu0
  %1884 = vdwg.mxu0
  %1885 = vmatpush.bf16.msra.mxu0 0
  %1886 = vmatpush.bf16.msra.mxu0 0
  %1887 = vmatpush.bf16.msra.mxu0 0
  %1888 = vmatpush.bf16.msra.mxu0 0
  %1889 = vmatpush.bf16.msra.mxu0 0
  %1890 = vmatpush.bf16.msra.mxu0 0
  %1891 = vmatpush.bf16.msra.mxu0 0
  %1892 = vmatpush.bf16.msra.mxu0 %v819
  %1893 = vmatmul.bf16.gmra.mxu0 %v208
  %v1894 = vpop.f32.mrf.mxu0
  %v1895 = vadd.f32 %v1415, %v1894
  %v1896 = vpop.f32.mrf.mxu0
  %1897 = vdwg.mxu0
  %1898 = vmatpush.bf16.msra.mxu0 0
  %1899 = vmatpush.bf16.msra.mxu0 0
  %1900 = vmatpush.bf16.msra.mxu0 0
  %1901 = vmatpush.bf16.msra.mxu0 0
  %1902 = vmatpush.bf16.msra.mxu0 0
  %1903 = vmatpush.bf16.msra.mxu0 0
  %1904 = vmatpush.bf16.msra.mxu0 0
  %1905 = vmatpush.bf16.msra.mxu0 %v838
  %1906 = vmatmul.bf16.gmra.mxu0 %v227
  %v1907 = vpop.f32.mrf.mxu0
  %v1908 = vadd.f32 %v1428, %v1907
  %v1909 = vpop.f32.mrf.mxu0
  %1910 = vdwg.mxu0
  %1911 = vmatpush.bf16.msra.mxu0 0
  %1912 = vmatpush.bf16.msra.mxu0 0
  %1913 = vmatpush.bf16.msra.mxu0 0
  %1914 = vmatpush.bf16.msra.mxu0 0
  %1915 = vmatpush.bf16.msra.mxu0 0
  %1916 = vmatpush.bf16.msra.mxu0 0
  %1917 = vmatpush.bf16.msra.mxu0 0
  %1918 = vmatpush.bf16.msra.mxu0 %v857
  %1919 = vmatmul.bf16.gmra.mxu0 %v246
  %v1920 = vpop.f32.mrf.mxu0
  %v1921 = vadd.f32 %v1441, %v1920
  %v1922 = vpop.f32.mrf.mxu0
  %1923 = vdwg.mxu0
  %1924 = vmatpush.bf16.msra.mxu0 0
  %1925 = vmatpush.bf16.msra.mxu0 0
  %1926 = vmatpush.bf16.msra.mxu0 0
  %1927 = vmatpush.bf16.msra.mxu0 0
  %1928 = vmatpush.bf16.msra.mxu0 0
  %1929 = vmatpush.bf16.msra.mxu0 0
  %1930 = vmatpush.bf16.msra.mxu0 0
  %1931 = vmatpush.bf16.msra.mxu0 %v876
  %1932 = vmatmul.bf16.gmra.mxu0 %v265
  %v1933 = vpop.f32.mrf.mxu0
  %v1934 = vadd.f32 %v1454, %v1933
  %v1935 = vpop.f32.mrf.mxu0
  %1936 = vdwg.mxu0
  %1937 = vmatpush.bf16.msra.mxu0 0
  %1938 = vmatpush.bf16.msra.mxu0 0
  %1939 = vmatpush.bf16.msra.mxu0 0
  %1940 = vmatpush.bf16.msra.mxu0 0
  %1941 = vmatpush.bf16.msra.mxu0 0
  %1942 = vmatpush.bf16.msra.mxu0 0
  %1943 = vmatpush.bf16.msra.mxu0 0
  %1944 = vmatpush.bf16.msra.mxu0 %v895
  %1945 = vmatmul.bf16.gmra.mxu0 %v284
  %v1946 = vpop.f32.mrf.mxu0
  %v1947 = vadd.f32 %v1467, %v1946
  %v1948 = vpop.f32.mrf.mxu0
  %1949 = vdwg.mxu0
  %1950 = vmatpush.bf16.msra.mxu0 0
  %1951 = vmatpush.bf16.msra.mxu0 0
  %1952 = vmatpush.bf16.msra.mxu0 0
  %1953 = vmatpush.bf16.msra.mxu0 0
  %1954 = vmatpush.bf16.msra.mxu0 0
  %1955 = vmatpush.bf16.msra.mxu0 0
  %1956 = vmatpush.bf16.msra.mxu0 0
  %1957 = vmatpush.bf16.msra.mxu0 %v914
  %1958 = vmatmul.bf16.gmra.mxu0 %v303
  %v1959 = vpop.f32.mrf.mxu0
  %v1960 = vadd.f32 %v1480, %v1959
  %v1961 = vpop.f32.mrf.mxu0
  %1962 = vdwg.mxu0
  %1963 = vmatpush.bf16.msra.mxu0 0
  %1964 = vmatpush.bf16.msra.mxu0 0
  %1965 = vmatpush.bf16.msra.mxu0 0
  %1966 = vmatpush.bf16.msra.mxu0 0
  %1967 = vmatpush.bf16.msra.mxu0 0
  %1968 = vmatpush.bf16.msra.mxu0 0
  %1969 = vmatpush.bf16.msra.mxu0 0
  %1970 = vmatpush.bf16.msra.mxu0 %v933
  %1971 = vmatmul.bf16.gmra.mxu0 %v322
  %v1972 = vpop.f32.mrf.mxu0
  %v1973 = vadd.f32 %v1493, %v1972
  %v1974 = vpop.f32.mrf.mxu0
  %1975 = vdwg.mxu0
  %1976 = vmatpush.bf16.msra.mxu0 0
  %1977 = vmatpush.bf16.msra.mxu0 0
  %1978 = vmatpush.bf16.msra.mxu0 0
  %1979 = vmatpush.bf16.msra.mxu0 0
  %1980 = vmatpush.bf16.msra.mxu0 0
  %1981 = vmatpush.bf16.msra.mxu0 0
  %1982 = vmatpush.bf16.msra.mxu0 0
  %1983 = vmatpush.bf16.msra.mxu0 %v952
  %1984 = vmatmul.bf16.gmra.mxu0 %v341
  %v1985 = vpop.f32.mrf.mxu0
  %v1986 = vadd.f32 %v1506, %v1985
  %v1987 = vpop.f32.mrf.mxu0
  %1988 = vdwg.mxu0
  %1989 = vmatpush.bf16.msra.mxu0 0
  %1990 = vmatpush.bf16.msra.mxu0 0
  %1991 = vmatpush.bf16.msra.mxu0 0
  %1992 = vmatpush.bf16.msra.mxu0 0
  %1993 = vmatpush.bf16.msra.mxu0 0
  %1994 = vmatpush.bf16.msra.mxu0 0
  %1995 = vmatpush.bf16.msra.mxu0 0
  %1996 = vmatpush.bf16.msra.mxu0 %v971
  %1997 = vmatmul.bf16.gmra.mxu0 %v360
  %v1998 = vpop.f32.mrf.mxu0
  %v1999 = vadd.f32 %v1519, %v1998
  %v2000 = vpop.f32.mrf.mxu0
  %2001 = vdwg.mxu0
  %2002 = vmatpush.bf16.msra.mxu0 0
  %2003 = vmatpush.bf16.msra.mxu0 0
  %2004 = vmatpush.bf16.msra.mxu0 0
  %2005 = vmatpush.bf16.msra.mxu0 0
  %2006 = vmatpush.bf16.msra.mxu0 0
  %2007 = vmatpush.bf16.msra.mxu0 0
  %2008 = vmatpush.bf16.msra.mxu0 0
  %2009 = vmatpush.bf16.msra.mxu0 %v990
  %2010 = vmatmul.bf16.gmra.mxu0 %v379
  %v2011 = vpop.f32.mrf.mxu0
  %v2012 = vadd.f32 %v1532, %v2011
  %v2013 = vpop.f32.mrf.mxu0
  %2014 = vdwg.mxu0
  %2015 = vmatpush.bf16.msra.mxu0 0
  %2016 = vmatpush.bf16.msra.mxu0 0
  %2017 = vmatpush.bf16.msra.mxu0 0
  %2018 = vmatpush.bf16.msra.mxu0 0
  %2019 = vmatpush.bf16.msra.mxu0 0
  %2020 = vmatpush.bf16.msra.mxu0 0
  %2021 = vmatpush.bf16.msra.mxu0 0
  %2022 = vmatpush.bf16.msra.mxu0 %v1009
  %2023 = vmatmul.bf16.gmra.mxu0 %v398
  %v2024 = vpop.f32.mrf.mxu0
  %v2025 = vadd.f32 %v1545, %v2024
  %v2026 = vpop.f32.mrf.mxu0
  %2027 = vdwg.mxu0
  %2028 = vmatpush.bf16.msra.mxu0 0
  %2029 = vmatpush.bf16.msra.mxu0 0
  %2030 = vmatpush.bf16.msra.mxu0 0
  %2031 = vmatpush.bf16.msra.mxu0 0
  %2032 = vmatpush.bf16.msra.mxu0 0
  %2033 = vmatpush.bf16.msra.mxu0 0
  %2034 = vmatpush.bf16.msra.mxu0 0
  %2035 = vmatpush.bf16.msra.mxu0 %v1028
  %2036 = vmatmul.bf16.gmra.mxu0 %v417
  %v2037 = vpop.f32.mrf.mxu0
  %v2038 = vadd.f32 %v1558, %v2037
  %v2039 = vpop.f32.mrf.mxu0
  %2040 = vdwg.mxu0
  %2041 = vmatpush.bf16.msra.mxu0 0
  %2042 = vmatpush.bf16.msra.mxu0 0
  %2043 = vmatpush.bf16.msra.mxu0 0
  %2044 = vmatpush.bf16.msra.mxu0 0
  %2045 = vmatpush.bf16.msra.mxu0 0
  %2046 = vmatpush.bf16.msra.mxu0 0
  %2047 = vmatpush.bf16.msra.mxu0 0
  %2048 = vmatpush.bf16.msra.mxu0 %v1047
  %2049 = vmatmul.bf16.gmra.mxu0 %v436
  %v2050 = vpop.f32.mrf.mxu0
  %v2051 = vadd.f32 %v1571, %v2050
  %v2052 = vpop.f32.mrf.mxu0
  %2053 = vdwg.mxu0
  %2054 = vmatpush.bf16.msra.mxu0 0
  %2055 = vmatpush.bf16.msra.mxu0 0
  %2056 = vmatpush.bf16.msra.mxu0 0
  %2057 = vmatpush.bf16.msra.mxu0 0
  %2058 = vmatpush.bf16.msra.mxu0 0
  %2059 = vmatpush.bf16.msra.mxu0 0
  %2060 = vmatpush.bf16.msra.mxu0 0
  %2061 = vmatpush.bf16.msra.mxu0 %v1066
  %2062 = vmatmul.bf16.gmra.mxu0 %v455
  %v2063 = vpop.f32.mrf.mxu0
  %v2064 = vadd.f32 %v1584, %v2063
  %v2065 = vpop.f32.mrf.mxu0
  %2066 = vdwg.mxu0
  %2067 = vmatpush.bf16.msra.mxu0 0
  %2068 = vmatpush.bf16.msra.mxu0 0
  %2069 = vmatpush.bf16.msra.mxu0 0
  %2070 = vmatpush.bf16.msra.mxu0 0
  %2071 = vmatpush.bf16.msra.mxu0 0
  %2072 = vmatpush.bf16.msra.mxu0 0
  %2073 = vmatpush.bf16.msra.mxu0 0
  %2074 = vmatpush.bf16.msra.mxu0 %v1085
  %2075 = vmatmul.bf16.gmra.mxu0 %v474
  %v2076 = vpop.f32.mrf.mxu0
  %v2077 = vadd.f32 %v1597, %v2076
  %v2078 = vpop.f32.mrf.mxu0
  %2079 = vdwg.mxu0
  %2080 = vmatpush.bf16.msra.mxu0 0
  %2081 = vmatpush.bf16.msra.mxu0 0
  %2082 = vmatpush.bf16.msra.mxu0 0
  %2083 = vmatpush.bf16.msra.mxu0 0
  %2084 = vmatpush.bf16.msra.mxu0 0
  %2085 = vmatpush.bf16.msra.mxu0 0
  %2086 = vmatpush.bf16.msra.mxu0 0
  %2087 = vmatpush.bf16.msra.mxu0 %v1104
  %2088 = vmatmul.bf16.gmra.mxu0 %v493
  %v2089 = vpop.f32.mrf.mxu0
  %v2090 = vadd.f32 %v1610, %v2089
  %v2091 = vpop.f32.mrf.mxu0
  %2092 = vdwg.mxu0
  %2093 = vmatpush.bf16.msra.mxu0 0
  %2094 = vmatpush.bf16.msra.mxu0 0
  %2095 = vmatpush.bf16.msra.mxu0 0
  %2096 = vmatpush.bf16.msra.mxu0 0
  %2097 = vmatpush.bf16.msra.mxu0 0
  %2098 = vmatpush.bf16.msra.mxu0 0
  %2099 = vmatpush.bf16.msra.mxu0 0
  %2100 = vmatpush.bf16.msra.mxu0 %v1123
  %2101 = vmatmul.bf16.gmra.mxu0 %v512
  %v2102 = vpop.f32.mrf.mxu0
  %v2103 = vadd.f32 %v1623, %v2102
  %v2104 = vpop.f32.mrf.mxu0
  %2105 = vdwg.mxu0
  %2106 = vmatpush.bf16.msra.mxu0 0
  %2107 = vmatpush.bf16.msra.mxu0 0
  %2108 = vmatpush.bf16.msra.mxu0 0
  %2109 = vmatpush.bf16.msra.mxu0 0
  %2110 = vmatpush.bf16.msra.mxu0 0
  %2111 = vmatpush.bf16.msra.mxu0 0
  %2112 = vmatpush.bf16.msra.mxu0 0
  %2113 = vmatpush.bf16.msra.mxu0 %v1142
  %2114 = vmatmul.bf16.gmra.mxu0 %v531
  %v2115 = vpop.f32.mrf.mxu0
  %v2116 = vadd.f32 %v1636, %v2115
  %v2117 = vpop.f32.mrf.mxu0
  %2118 = vdwg.mxu0
  %2119 = vmatpush.bf16.msra.mxu0 0
  %2120 = vmatpush.bf16.msra.mxu0 0
  %2121 = vmatpush.bf16.msra.mxu0 0
  %2122 = vmatpush.bf16.msra.mxu0 0
  %2123 = vmatpush.bf16.msra.mxu0 0
  %2124 = vmatpush.bf16.msra.mxu0 0
  %2125 = vmatpush.bf16.msra.mxu0 0
  %2126 = vmatpush.bf16.msra.mxu0 %v1161
  %2127 = vmatmul.bf16.gmra.mxu0 %v550
  %v2128 = vpop.f32.mrf.mxu0
  %v2129 = vadd.f32 %v1649, %v2128
  %v2130 = vpop.f32.mrf.mxu0
  %2131 = vdwg.mxu0
  %2132 = vmatpush.bf16.msra.mxu0 0
  %2133 = vmatpush.bf16.msra.mxu0 0
  %2134 = vmatpush.bf16.msra.mxu0 0
  %2135 = vmatpush.bf16.msra.mxu0 0
  %2136 = vmatpush.bf16.msra.mxu0 0
  %2137 = vmatpush.bf16.msra.mxu0 0
  %2138 = vmatpush.bf16.msra.mxu0 0
  %2139 = vmatpush.bf16.msra.mxu0 %v1180
  %2140 = vmatmul.bf16.gmra.mxu0 %v569
  %v2141 = vpop.f32.mrf.mxu0
  %v2142 = vadd.f32 %v1662, %v2141
  %v2143 = vpop.f32.mrf.mxu0
  %2144 = vdwg.mxu0
  %2145 = vmatpush.bf16.msra.mxu0 0
  %2146 = vmatpush.bf16.msra.mxu0 0
  %2147 = vmatpush.bf16.msra.mxu0 0
  %2148 = vmatpush.bf16.msra.mxu0 0
  %2149 = vmatpush.bf16.msra.mxu0 0
  %2150 = vmatpush.bf16.msra.mxu0 0
  %2151 = vmatpush.bf16.msra.mxu0 0
  %2152 = vmatpush.bf16.msra.mxu0 %v1199
  %2153 = vmatmul.bf16.gmra.mxu0 %v588
  %v2154 = vpop.f32.mrf.mxu0
  %v2155 = vadd.f32 %v1675, %v2154
  %v2156 = vpop.f32.mrf.mxu0
  %2157 = vdwg.mxu0
  %2158 = vmatpush.bf16.msra.mxu0 0
  %2159 = vmatpush.bf16.msra.mxu0 0
  %2160 = vmatpush.bf16.msra.mxu0 0
  %2161 = vmatpush.bf16.msra.mxu0 0
  %2162 = vmatpush.bf16.msra.mxu0 0
  %2163 = vmatpush.bf16.msra.mxu0 0
  %2164 = vmatpush.bf16.msra.mxu0 0
  %2165 = vmatpush.bf16.msra.mxu0 %v1218
  %2166 = vmatmul.bf16.gmra.mxu0 %v607
  %v2167 = vpop.f32.mrf.mxu0
  %v2168 = vadd.f32 %v1688, %v2167
  %v2169 = vpop.f32.mrf.mxu0
  %2170 = vdwg.mxu0
  %2171 = vmatpush.bf16.msra.mxu0 0
  %2172 = vmatpush.bf16.msra.mxu0 0
  %2173 = vmatpush.bf16.msra.mxu0 0
  %2174 = vmatpush.bf16.msra.mxu0 0
  %2175 = vmatpush.bf16.msra.mxu0 0
  %2176 = vmatpush.bf16.msra.mxu0 0
  %2177 = vmatpush.bf16.msra.mxu0 0
  %2178 = vmatpush.bf16.msra.mxu0 %v1237
  %2179 = vmatmul.bf16.gmra.mxu0 %v626
  %v2180 = vpop.f32.mrf.mxu0
  %v2181 = vadd.f32 %v1701, %v2180
  %v2182 = vpop.f32.mrf.mxu0
  %2183 = vdwg.mxu0
  %2184 = vmatpush.bf16.msra.mxu0 0
  %2185 = vmatpush.bf16.msra.mxu0 0
  %2186 = vmatpush.bf16.msra.mxu0 0
  %2187 = vmatpush.bf16.msra.mxu0 0
  %2188 = vmatpush.bf16.msra.mxu0 0
  %2189 = vmatpush.bf16.msra.mxu0 0
  %2190 = vmatpush.bf16.msra.mxu0 0
  %2191 = vmatpush.bf16.msra.mxu0 %v1256
  %2192 = vmatmul.bf16.gmra.mxu0 %v645
  %v2193 = vpop.f32.mrf.mxu0
  %v2194 = vadd.f32 %v1714, %v2193
  %v2195 = vpop.f32.mrf.mxu0
  %2196 = vdwg.mxu0
  %2197 = vmatpush.bf16.msra.mxu0 0
  %2198 = vmatpush.bf16.msra.mxu0 0
  %2199 = vmatpush.bf16.msra.mxu0 0
  %2200 = vmatpush.bf16.msra.mxu0 0
  %2201 = vmatpush.bf16.msra.mxu0 0
  %2202 = vmatpush.bf16.msra.mxu0 0
  %2203 = vmatpush.bf16.msra.mxu0 0
  %2204 = vmatpush.bf16.msra.mxu0 %v1275
  %2205 = vmatmul.bf16.gmra.mxu0 %v664
  %v2206 = vpop.f32.mrf.mxu0
  %v2207 = vadd.f32 %v1727, %v2206
  %v2208 = vpop.f32.mrf.mxu0
  %2209 = vdwg.mxu0
  %2210 = vmatpush.bf16.msra.mxu0 0
  %2211 = vmatpush.bf16.msra.mxu0 0
  %2212 = vmatpush.bf16.msra.mxu0 0
  %2213 = vmatpush.bf16.msra.mxu0 0
  %2214 = vmatpush.bf16.msra.mxu0 0
  %2215 = vmatpush.bf16.msra.mxu0 0
  %2216 = vmatpush.bf16.msra.mxu0 0
  %2217 = vmatpush.bf16.msra.mxu0 %v1294
  %2218 = vmatmul.bf16.gmra.mxu0 %v683
  %v2219 = vpop.f32.mrf.mxu0
  %v2220 = vadd.f32 %v1740, %v2219
  %v2221 = vpop.f32.mrf.mxu0
  %2222 = vdwg.mxu0
  %2223 = vmatpush.bf16.msra.mxu0 0
  %2224 = vmatpush.bf16.msra.mxu0 0
  %2225 = vmatpush.bf16.msra.mxu0 0
  %2226 = vmatpush.bf16.msra.mxu0 0
  %2227 = vmatpush.bf16.msra.mxu0 0
  %2228 = vmatpush.bf16.msra.mxu0 0
  %2229 = vmatpush.bf16.msra.mxu0 0
  %2230 = vmatpush.bf16.msra.mxu0 %v1313
  %2231 = vmatmul.bf16.gmra.mxu0 %v702
  %v2232 = vpop.f32.mrf.mxu0
  %v2233 = vadd.f32 %v1753, %v2232
  %v2234 = vpop.f32.mrf.mxu0
  %2235 = vdwg.mxu0
  %2236 = vmatpush.bf16.msra.mxu0 0
  %2237 = vmatpush.bf16.msra.mxu0 0
  %2238 = vmatpush.bf16.msra.mxu0 0
  %2239 = vmatpush.bf16.msra.mxu0 0
  %2240 = vmatpush.bf16.msra.mxu0 0
  %2241 = vmatpush.bf16.msra.mxu0 0
  %2242 = vmatpush.bf16.msra.mxu0 0
  %2243 = vmatpush.bf16.msra.mxu0 %v1332
  %2244 = vmatmul.bf16.gmra.mxu0 %v721
  %v2245 = vpop.f32.mrf.mxu0
  %v2246 = vadd.f32 %v1766, %v2245
  %v2247 = vpop.f32.mrf.mxu0
  %2248 = vdwg.mxu0
  %2249 = vmatpush.bf16.msra.mxu0 0
  %2250 = vmatpush.bf16.msra.mxu0 0
  %2251 = vmatpush.bf16.msra.mxu0 0
  %2252 = vmatpush.bf16.msra.mxu0 0
  %2253 = vmatpush.bf16.msra.mxu0 0
  %2254 = vmatpush.bf16.msra.mxu0 0
  %2255 = vmatpush.bf16.msra.mxu0 0
  %2256 = vmatpush.bf16.msra.mxu0 %v1351
  %2257 = vmatmul.bf16.gmra.mxu0 %v740
  %v2258 = vpop.f32.mrf.mxu0
  %v2259 = vadd.f32 %v1779, %v2258
  %v2260 = vpop.f32.mrf.mxu0
  %2261 = vdwg.mxu0
  %2262 = vst.msk [vmem:[%s5] sm:$0xff] %vm148, %v1856
  %2263 = vst.msk [vmem:[%s5 + $0x8] sm:$0xff] %vm148, %v1869
  %2264 = vst.msk [vmem:[%s5 + $0x10] sm:$0xff] %vm148, %v1882
  %2265 = vst.msk [vmem:[%s5 + $0x18] sm:$0xff] %vm148, %v1895
  %2266 = vst.msk [vmem:[%s5 + $0x20] sm:$0xff] %vm148, %v1908
  %2267 = vst.msk [vmem:[%s5 + $0x28] sm:$0xff] %vm148, %v1921
  %2268 = vst.msk [vmem:[%s5 + $0x30] sm:$0xff] %vm148, %v1934
  %2269 = vst.msk [vmem:[%s5 + $0x38] sm:$0xff] %vm148, %v1947
  %2270 = vst.msk [vmem:[%s5 + $0x40] sm:$0xff] %vm148, %v1960
  %2271 = vst.msk [vmem:[%s5 + $0x48] sm:$0xff] %vm148, %v1973
  %2272 = vst.msk [vmem:[%s5 + $0x50] sm:$0xff] %vm148, %v1986
  %2273 = vst.msk [vmem:[%s5 + $0x58] sm:$0xff] %vm148, %v1999
  %2274 = vst.msk [vmem:[%s5 + $0x60] sm:$0xff] %vm148, %v2012
  %2275 = vst.msk [vmem:[%s5 + $0x68] sm:$0xff] %vm148, %v2025
  %2276 = vst.msk [vmem:[%s5 + $0x70] sm:$0xff] %vm148, %v2038
  %2277 = vst.msk [vmem:[%s5 + $0x78] sm:$0xff] %vm148, %v2051
  %2278 = vst.msk [vmem:[%s5 + $0x80] sm:$0xff] %vm148, %v2064
  %2279 = vst.msk [vmem:[%s5 + $0x88] sm:$0xff] %vm148, %v2077
  %2280 = vst.msk [vmem:[%s5 + $0x90] sm:$0xff] %vm148, %v2090
  %2281 = vst.msk [vmem:[%s5 + $0x98] sm:$0xff] %vm148, %v2103
  %2282 = vst.msk [vmem:[%s5 + $0xa0] sm:$0xff] %vm148, %v2116
  %2283 = vst.msk [vmem:[%s5 + $0xa8] sm:$0xff] %vm148, %v2129
  %2284 = vst.msk [vmem:[%s5 + $0xb0] sm:$0xff] %vm148, %v2142
  %2285 = vst.msk [vmem:[%s5 + $0xb8] sm:$0xff] %vm148, %v2155
  %2286 = vst.msk [vmem:[%s5 + $0xc0] sm:$0xff] %vm148, %v2168
  %2287 = vst.msk [vmem:[%s5 + $0xc8] sm:$0xff] %vm148, %v2181
  %2288 = vst.msk [vmem:[%s5 + $0xd0] sm:$0xff] %vm148, %v2194
  %2289 = vst.msk [vmem:[%s5 + $0xd8] sm:$0xff] %vm148, %v2207
  %2290 = vst.msk [vmem:[%s5 + $0xe0] sm:$0xff] %vm148, %v2220
  %2291 = vst.msk [vmem:[%s5 + $0xe8] sm:$0xff] %vm148, %v2233
  %2292 = vst.msk [vmem:[%s5 + $0xf0] sm:$0xff] %vm148, %v2246
  %2293 = vst.msk [vmem:[%s5 + $0xf8] sm:$0xff] %vm148, %v2259
  // Predicated region
  $region18: #{tpu_custom_call.1} parent=0 // pred_check
    _
  $region19: #{tpu_custom_call.1} parent=0 // pred_check_branch
    %2295 = sbr.rel (0) target = $region21
  $region20: #{tpu_custom_call.1} parent=0 // pred_region
    _
  $region21: #{tpu_custom_call.1} parent=0 // pred_fallthru
    _
  // Predicated region
  $region22: #{tpu_custom_call.1} parent=0 // pred_check
    _
  $region23: #{tpu_custom_call.1} parent=0 // pred_check_branch
    %2297 = sbr.rel (0) target = $region25
  $region24: #{tpu_custom_call.1} parent=0 // pred_region
    _
  $region25: #{tpu_custom_call.1} parent=0 // pred_fallthru
    _
  // Predicated region
  $region26: #{tpu_custom_call.1} parent=0 // pred_check
    _
  $region27: #{tpu_custom_call.1} parent=0 // pred_check_branch
    %2299 = sbr.rel (0) target = $region29
  $region28: #{tpu_custom_call.1} parent=0 // pred_region
    _
  $region29: #{tpu_custom_call.1} parent=0 // pred_fallthru
    _
  // Predicated region
  $region30: #{tpu_custom_call.1} parent=0 // pred_check
    _
  $region31: #{tpu_custom_call.1} parent=0 // pred_check_branch
    %2301 = sbr.rel (0) target = $region33
  $region32: #{tpu_custom_call.1} parent=0 // pred_region
    _
  $region33: #{tpu_custom_call.1} parent=0 // pred_fallthru
    _

</llo_original>
